<compile_context>
chip_gen: v7x
topology: tpu7x:2x2x1
jax: 0.10.0
libtpu: 0.0.40
codegen_flags: <defaults>
</compile_context>

<pallas_src>
import functools
import math

import jax
import jax.numpy as jnp
from jax import lax
from jax.experimental import pallas as pl
from jax.experimental.pallas import tpu as pltpu


def _attn_group_kernel(xf_ref, wq_ref, wk_ref, wv_ref,
                       bq_ref, bk_ref, bv_ref, o_ref,
                       k_sc, v_sc, *, block_q, g, d_k):
    """One (batch, head-group, q-tile) grid step.

    xf_ref : (1, S, E)           full-sequence input rows of this batch
    w*_ref : (1, E, g*d_k)       pre-transposed per-group projection weights
                                 (Wq already folded with 1/sqrt(d_k))
    b*_ref : (1, 1, g*d_k)       per-group biases (bq scaled too)
    o_ref  : (1, block_q, g*d_k) slab of the (B, S, E) output
    k_sc/v_sc : (S, g*d_k) f32 VMEM scratch — K/V cache for this (b, group)
    """
    qi = pl.program_id(2)

    # K/V projections only once per (batch, head-group); reused across q tiles.
    @pl.when(qi == 0)
    def _():
        xf = xf_ref[0]                                              # (S, E)
        k_sc[...] = jnp.dot(xf, wk_ref[0],
                            preferred_element_type=jnp.float32) + bk_ref[0]
        v_sc[...] = jnp.dot(xf, wv_ref[0],
                            preferred_element_type=jnp.float32) + bv_ref[0]

    # Query rows sliced straight out of the full-sequence block
    # (no second x input stream / DMA).
    start = pl.multiple_of(qi * block_q, block_q)
    xq = xf_ref[0, pl.ds(start, block_q), :]                        # (block_q, E)
    # Wide projection: scale already folded into Wq / bq on the host.
    q = jnp.dot(xq, wq_ref[0],
                preferred_element_type=jnp.float32) + bq_ref[0]     # (block_q, g*d_k)

    k = k_sc[...]                                                   # (S, g*d_k)
    v = v_sc[...]

    # Per-head attention inside the group (static, unrolled lane slices).
    for hd in range(g):
        cs = hd * d_k
        qh = q[:, cs:cs + d_k]
        kh = k[:, cs:cs + d_k]
        vh = v[:, cs:cs + d_k]
        # Scores: contract d_k directly (no k.T materialization).
        s = lax.dot_general(qh, kh, (((1,), (1,)), ((), ())),
                            preferred_element_type=jnp.float32)     # (block_q, S)
        m = jnp.max(s, axis=-1, keepdims=True)
        p = jnp.exp(s - m)
        denom = jnp.sum(p, axis=-1, keepdims=True)
        # Normalize AFTER the PV matmul: (block_q, d_k) multiply instead of
        # (block_q, S); reciprocal routed to the EUP slot.
        oh = jnp.dot(p.astype(vh.dtype), vh,
                     preferred_element_type=jnp.float32)            # (block_q, d_k)
        oh = oh * pl.reciprocal(denom, approx=True)
        o_ref[0, :, cs:cs + d_k] = oh.astype(o_ref.dtype)


def _head_group_size(h, d_k):
    """Smallest group size g (dividing h) whose slab width g*d_k is a multiple
    of 128 lanes; falls back to all heads (slab width == E)."""
    for g in range(1, h + 1):
        if h % g == 0 and (g * d_k) % 128 == 0:
            return g
    return h


def attention_layer(x, wq, wk, wv, bq, bk, bv, *, h, block_q=None):
    """Multi-head self-attention matching AttentionLayer.forward (mask=None).

    x : (B, S, E); wq/wk/wv : (E, E) nn.Linear weights; bq/bk/bv : (E,).
    Returns (B, S, E).
    """
    B, S, E = x.shape
    assert E % h == 0, "embed_size must be divisible by h"
    d_k = E // h
    scale = 1.0 / math.sqrt(d_k)

    g = _head_group_size(h, d_k)
    n_hg = h // g
    gdk = g * d_k

    if block_q is None:
        # Cap the q tile so the (block_q, S) score tile stays VMEM-friendly.
        block_q = S if S <= 256 else (256 if S % 256 == 0 else S)
    assert S % block_q == 0
    n_q = S // block_q

    # Host-side layout prep (done once, outside the kernel).
    # Head group gi owns output columns [gi*gdk:(gi+1)*gdk] of W.T.
    def per_group_w(w, s=1.0):      # (E, E) -> (n_hg, E, g*d_k);  y = x @ W.T
        return (w.T * s).reshape(E, n_hg, gdk).transpose(1, 0, 2)

    def per_group_b(b, s=1.0):      # (E,) -> (n_hg, 1, g*d_k)
        return (b * s).reshape(n_hg, 1, gdk)

    wqg, wkg, wvg = per_group_w(wq, scale), per_group_w(wk), per_group_w(wv)
    bqg, bkg, bvg = per_group_b(bq, scale), per_group_b(bk), per_group_b(bv)

    kernel = functools.partial(_attn_group_kernel,
                               block_q=block_q, g=g, d_k=d_k)

    # VMEM budget -> explicit scoped limit (capped at 64 MiB so it is valid on
    # v7x too; v5e/v6e have 128 MiB physical).
    itemsize = 4
    per_step = itemsize * (
        2 * S * E                # xf block (double-buffered)
        + 2 * 3 * E * gdk        # projection weight blocks
        + 2 * block_q * gdk      # output block
        + 2 * S * gdk            # K/V scratch
        + 3 * g * block_q * S    # score / p temporaries
        + 4 * block_q * E        # q / xq temporaries
    )
    vmem_limit = int(min(max(2 * per_step, 32 * 1024 * 1024), 64 * 1024 * 1024))

    return pl.pallas_call(
        kernel,
        out_shape=jax.ShapeDtypeStruct((B, S, E), x.dtype),
        grid_spec=pltpu.PrefetchScalarGridSpec(
            num_scalar_prefetch=0,
            grid=(B, n_hg, n_q),
            in_specs=[
                pl.BlockSpec((1, S, E),   lambda b, hg, qi: (b, 0, 0)),   # x (full seq)
                pl.BlockSpec((1, E, gdk), lambda b, hg, qi: (hg, 0, 0)),  # Wq.T group (scaled)
                pl.BlockSpec((1, E, gdk), lambda b, hg, qi: (hg, 0, 0)),  # Wk.T group
                pl.BlockSpec((1, E, gdk), lambda b, hg, qi: (hg, 0, 0)),  # Wv.T group
                pl.BlockSpec((1, 1, gdk), lambda b, hg, qi: (hg, 0, 0)),  # bq group (scaled)
                pl.BlockSpec((1, 1, gdk), lambda b, hg, qi: (hg, 0, 0)),  # bk group
                pl.BlockSpec((1, 1, gdk), lambda b, hg, qi: (hg, 0, 0)),  # bv group
            ],
            out_specs=pl.BlockSpec((1, block_q, gdk),
                                   lambda b, hg, qi: (b, qi, hg)),
            scratch_shapes=[pltpu.VMEM((S, gdk), jnp.float32),   # K cache
                            pltpu.VMEM((S, gdk), jnp.float32)],  # V cache
        ),
        compiler_params=pltpu.CompilerParams(
            dimension_semantics=("parallel", "parallel", "arbitrary"),
            vmem_limit_bytes=vmem_limit),
    )(x, wqg, wkg, wvg, bqg, bkg, bvg)


def reference_attention(x, wq, wk, wv, bq, bk, bv, *, h):
    """Pure-JAX reference mirroring the PyTorch forward exactly."""
    B, S, E = x.shape
    d_k = E // h
    q = x @ wq.T + bq
    k = x @ wk.T + bk
    v = x @ wv.T + bv

    def split(t):  # (B, S, E) -> (B, h, S, d_k)
        return t.reshape(B, S, h, d_k).transpose(0, 2, 1, 3)

    q, k, v = split(q), split(k), split(v)
    scores = jnp.einsum('bhqd,bhkd->bhqk', q, k) / math.sqrt(d_k)
    p = jax.nn.softmax(scores, axis=-1)
    out = jnp.einsum('bhqk,bhkd->bhqd', p, v)
    return out.transpose(0, 2, 1, 3).reshape(B, S, E)


if __name__ == "__main__":
    B, S, E, H = 2, 8, 32, 4   # embed_size=32, h=4 -> d_k=8

    key = jax.random.PRNGKey(0)
    kx, kq, kk, kv, kbq, kbk, kbv = jax.random.split(key, 7)

    bound = 1.0 / math.sqrt(E)   # nn.Linear default init range
    x  = jax.random.normal(kx, (B, S, E), dtype=jnp.float32)
    wq = jax.random.uniform(kq,  (E, E), minval=-bound, maxval=bound, dtype=jnp.float32)
    wk = jax.random.uniform(kk,  (E, E), minval=-bound, maxval=bound, dtype=jnp.float32)
    wv = jax.random.uniform(kv,  (E, E), minval=-bound, maxval=bound, dtype=jnp.float32)
    bq = jax.random.uniform(kbq, (E,),   minval=-bound, maxval=bound, dtype=jnp.float32)
    bk = jax.random.uniform(kbk, (E,),   minval=-bound, maxval=bound, dtype=jnp.float32)
    bv = jax.random.uniform(kbv, (E,),   minval=-bound, maxval=bound, dtype=jnp.float32)

    out = attention_layer(x, wq, wk, wv, bq, bk, bv, h=H)
    out = jax.block_until_ready(out)

    ref = reference_attention(x, wq, wk, wv, bq, bk, bv, h=H)
    assert out.shape == (B, S, E)
    # Tolerance relaxed slightly vs 1e-4 because the softmax denominator uses
    # the EUP approximate reciprocal (pl.reciprocal(approx=True)).
    max_err = float(jnp.max(jnp.abs(out - ref)))
    assert jnp.allclose(out, ref, atol=2e-3, rtol=2e-3), \
        f"mismatch vs reference (max abs err {max_err})"

    print("KERNEL_OK")
</pallas_src>

<mosaic_0001>
module attributes {stable_mosaic.version = 11 : i64} {
  func.func @_attn_group_kernel(%arg0: i32, %arg1: i32, %arg2: i32, %arg3: memref<1x8x32xf32, #tpu.memory_space<vmem>>, %arg4: memref<1x32x32xf32, #tpu.memory_space<vmem>>, %arg5: memref<1x32x32xf32, #tpu.memory_space<vmem>>, %arg6: memref<1x32x32xf32, #tpu.memory_space<vmem>>, %arg7: memref<1x1x32xf32, #tpu.memory_space<vmem>>, %arg8: memref<1x1x32xf32, #tpu.memory_space<vmem>>, %arg9: memref<1x1x32xf32, #tpu.memory_space<vmem>>, %arg10: memref<1x8x32xf32, #tpu.memory_space<vmem>>, %arg11: memref<8x32xf32, #tpu.memory_space<vmem>>, %arg12: memref<8x32xf32, #tpu.memory_space<vmem>>) attributes {dimension_semantics = [#tpu.dimension_semantics<parallel>, #tpu.dimension_semantics<parallel>, #tpu.dimension_semantics<arbitrary>], iteration_bounds = array<i64: 2, 1, 1>, scalar_prefetch = 0 : i64, scratch_operands = 2 : i64, tpu.core_type = #tpu.core_type<tc>, window_params = [{transform_indices = @transform_0, window_bounds = array<i64: 1, 8, 32>}, {transform_indices = @transform_1, window_bounds = array<i64: 1, 32, 32>}, {transform_indices = @transform_2, window_bounds = array<i64: 1, 32, 32>}, {transform_indices = @transform_3, window_bounds = array<i64: 1, 32, 32>}, {transform_indices = @transform_4, window_bounds = array<i64: 1, 1, 32>}, {transform_indices = @transform_5, window_bounds = array<i64: 1, 1, 32>}, {transform_indices = @transform_6, window_bounds = array<i64: 1, 1, 32>}, {transform_indices = @transform_7, window_bounds = array<i64: 1, 8, 32>}]} {
    %c0_i32 = arith.constant 0 : i32
    %0 = arith.cmpi eq, %arg2, %c0_i32 : i32
    %1 = arith.extui %0 : i1 to i32
    %c0_i32_0 = arith.constant 0 : i32
    %2 = arith.cmpi ne, %1, %c0_i32_0 : i32
    scf.if %2 {
      %c0_37 = arith.constant 0 : index
      %c0_38 = arith.constant 0 : index
      %c0_39 = arith.constant 0 : index
      %89 = vector.load %arg3[%c0_37, %c0_38, %c0_39] : memref<1x8x32xf32, #tpu.memory_space<vmem>>, vector<1x8x32xf32>
      %90 = vector.shape_cast %89 : vector<1x8x32xf32> to vector<8x32xf32>
      %c0_40 = arith.constant 0 : index
      %c0_41 = arith.constant 0 : index
      %c0_42 = arith.constant 0 : index
      %91 = vector.load %arg5[%c0_40, %c0_41, %c0_42] : memref<1x32x32xf32, #tpu.memory_space<vmem>>, vector<1x32x32xf32>
      %92 = vector.shape_cast %91 : vector<1x32x32xf32> to vector<32x32xf32>
      %cst_43 = arith.constant dense<0.000000e+00> : vector<8x32xf32>
      %93 = tpu.matmul %90, %92, %cst_43 {dimension_numbers = #tpu.dot_dimension_numbers<[1], [0], [0], [1], [0, 0, 1, 1], [], []>} : vector<8x32xf32>, vector<32x32xf32>, vector<8x32xf32> -> vector<8x32xf32>
      %c0_44 = arith.constant 0 : index
      %c0_45 = arith.constant 0 : index
      %c0_46 = arith.constant 0 : index
      %94 = vector.load %arg8[%c0_44, %c0_45, %c0_46] : memref<1x1x32xf32, #tpu.memory_space<vmem>>, vector<1x1x32xf32>
      %95 = vector.shape_cast %94 : vector<1x1x32xf32> to vector<1x32xf32>
      %96 = vector.broadcast %95 : vector<1x32xf32> to vector<8x32xf32>
      %97 = arith.addf %93, %96 : vector<8x32xf32>
      %c0_47 = arith.constant 0 : index
      %c0_48 = arith.constant 0 : index
      %98 = vector.load %arg11[%c0_47, %c0_48] : memref<8x32xf32, #tpu.memory_space<vmem>>, vector<8x32xf32>
      tpu.vector_store %arg11[%c0_47, %c0_48], %97 {strides = array<i32>} : memref<8x32xf32, #tpu.memory_space<vmem>>, vector<8x32xf32>,
      %c0_49 = arith.constant 0 : index
      %c0_50 = arith.constant 0 : index
      %c0_51 = arith.constant 0 : index
      %99 = vector.load %arg6[%c0_49, %c0_50, %c0_51] : memref<1x32x32xf32, #tpu.memory_space<vmem>>, vector<1x32x32xf32>
      %100 = vector.shape_cast %99 : vector<1x32x32xf32> to vector<32x32xf32>
      %cst_52 = arith.constant dense<0.000000e+00> : vector<8x32xf32>
      %101 = tpu.matmul %90, %100, %cst_52 {dimension_numbers = #tpu.dot_dimension_numbers<[1], [0], [0], [1], [0, 0, 1, 1], [], []>} : vector<8x32xf32>, vector<32x32xf32>, vector<8x32xf32> -> vector<8x32xf32>
      %c0_53 = arith.constant 0 : index
      %c0_54 = arith.constant 0 : index
      %c0_55 = arith.constant 0 : index
      %102 = vector.load %arg9[%c0_53, %c0_54, %c0_55] : memref<1x1x32xf32, #tpu.memory_space<vmem>>, vector<1x1x32xf32>
      %103 = vector.shape_cast %102 : vector<1x1x32xf32> to vector<1x32xf32>
      %104 = vector.broadcast %103 : vector<1x32xf32> to vector<8x32xf32>
      %105 = arith.addf %101, %104 : vector<8x32xf32>
      %c0_56 = arith.constant 0 : index
      %c0_57 = arith.constant 0 : index
      %106 = vector.load %arg12[%c0_56, %c0_57] : memref<8x32xf32, #tpu.memory_space<vmem>>, vector<8x32xf32>
      tpu.vector_store %arg12[%c0_56, %c0_57], %105 {strides = array<i32>} : memref<8x32xf32, #tpu.memory_space<vmem>>, vector<8x32xf32>,
    } else {
    }
    %c8_i32 = arith.constant 8 : i32
    %3 = arith.muli %arg2, %c8_i32 : i32
    %4 = tpu.assume_multiple %3, 8 : i32
    %c0 = arith.constant 0 : index
    %5 = arith.index_cast %4 : i32 to index
    %c0_1 = arith.constant 0 : index
    %6 = vector.load %arg3[%c0, %5, %c0_1] : memref<1x8x32xf32, #tpu.memory_space<vmem>>, vector<1x8x32xf32>
    %7 = vector.shape_cast %6 : vector<1x8x32xf32> to vector<8x32xf32>
    %c0_2 = arith.constant 0 : index
    %c0_3 = arith.constant 0 : index
    %c0_4 = arith.constant 0 : index
    %8 = vector.load %arg4[%c0_2, %c0_3, %c0_4] : memref<1x32x32xf32, #tpu.memory_space<vmem>>, vector<1x32x32xf32>
    %9 = vector.shape_cast %8 : vector<1x32x32xf32> to vector<32x32xf32>
    %cst = arith.constant dense<0.000000e+00> : vector<8x32xf32>
    %10 = tpu.matmul %7, %9, %cst {dimension_numbers = #tpu.dot_dimension_numbers<[1], [0], [0], [1], [0, 0, 1, 1], [], []>} : vector<8x32xf32>, vector<32x32xf32>, vector<8x32xf32> -> vector<8x32xf32>
    %c0_5 = arith.constant 0 : index
    %c0_6 = arith.constant 0 : index
    %c0_7 = arith.constant 0 : index
    %11 = vector.load %arg7[%c0_5, %c0_6, %c0_7] : memref<1x1x32xf32, #tpu.memory_space<vmem>>, vector<1x1x32xf32>
    %12 = vector.shape_cast %11 : vector<1x1x32xf32> to vector<1x32xf32>
    %13 = vector.broadcast %12 : vector<1x32xf32> to vector<8x32xf32>
    %14 = arith.addf %10, %13 : vector<8x32xf32>
    %c0_8 = arith.constant 0 : index
    %c0_9 = arith.constant 0 : index
    %15 = vector.load %arg11[%c0_8, %c0_9] : memref<8x32xf32, #tpu.memory_space<vmem>>, vector<8x32xf32>
    %c0_10 = arith.constant 0 : index
    %c0_11 = arith.constant 0 : index
    %16 = vector.load %arg12[%c0_10, %c0_11] : memref<8x32xf32, #tpu.memory_space<vmem>>, vector<8x32xf32>
    %17 = vector.extract_strided_slice %14 {offsets = [0, 0], sizes = [8, 8], strides = [1, 1]} : vector<8x32xf32> to vector<8x8xf32>
    %18 = vector.extract_strided_slice %15 {offsets = [0, 0], sizes = [8, 8], strides = [1, 1]} : vector<8x32xf32> to vector<8x8xf32>
    %19 = vector.extract_strided_slice %16 {offsets = [0, 0], sizes = [8, 8], strides = [1, 1]} : vector<8x32xf32> to vector<8x8xf32>
    %cst_12 = arith.constant dense<0.000000e+00> : vector<8x8xf32>
    %20 = tpu.matmul %17, %18, %cst_12 {dimension_numbers = #tpu.dot_dimension_numbers<[1], [1], [0], [0], [0, 0, 1, 0], [], []>} : vector<8x8xf32>, vector<8x8xf32>, vector<8x8xf32> -> vector<8x8xf32>
    %cst_13 = arith.constant dense<0xFF800000> : vector<8xf32>
    %21 = vector.multi_reduction <maximumf>, %20, %cst_13 [1] : vector<8x8xf32> to vector<8xf32>
    %22 = vector.shape_cast %21 : vector<8xf32> to vector<8x1xf32>
    %23 = vector.broadcast %22 : vector<8x1xf32> to vector<8x8xf32>
    %24 = arith.subf %20, %23 : vector<8x8xf32>
    %25 = math.exp %24 : vector<8x8xf32>
    %cst_14 = arith.constant dense<0.000000e+00> : vector<8xf32>
    %26 = vector.multi_reduction <add>, %25, %cst_14 [1] : vector<8x8xf32> to vector<8xf32>
    %27 = vector.shape_cast %26 : vector<8xf32> to vector<8x1xf32>
    %cst_15 = arith.constant dense<0.000000e+00> : vector<8x8xf32>
    %28 = tpu.matmul %25, %19, %cst_15 {dimension_numbers = #tpu.dot_dimension_numbers<[1], [0], [0], [1], [0, 0, 1, 1], [], []>} : vector<8x8xf32>, vector<8x8xf32>, vector<8x8xf32> -> vector<8x8xf32>
    %29 = tpu.reciprocal %27 {approx = true} : vector<8x1xf32> -> vector<8x1xf32>
    %30 = vector.broadcast %29 : vector<8x1xf32> to vector<8x8xf32>
    %31 = arith.mulf %28, %30 : vector<8x8xf32>
    %c0_16 = arith.constant 0 : index
    %c0_17 = arith.constant 0 : index
    %c0_18 = arith.constant 0 : index
    %32 = vector.load %arg10[%c0_16, %c0_17, %c0_18] : memref<1x8x32xf32, #tpu.memory_space<vmem>>, vector<1x8x8xf32>
    %33 = vector.shape_cast %32 : vector<1x8x8xf32> to vector<8x8xf32>
    %34 = vector.shape_cast %31 : vector<8x8xf32> to vector<1x8x8xf32>
    tpu.vector_store %arg10[%c0_16, %c0_17, %c0_18], %34 {strides = array<i32>} : memref<1x8x32xf32, #tpu.memory_space<vmem>>, vector<1x8x8xf32>,
    %35 = vector.extract_strided_slice %14 {offsets = [0, 8], sizes = [8, 8], strides = [1, 1]} : vector<8x32xf32> to vector<8x8xf32>
    %36 = vector.extract_strided_slice %15 {offsets = [0, 8], sizes = [8, 8], strides = [1, 1]} : vector<8x32xf32> to vector<8x8xf32>
    %37 = vector.extract_strided_slice %16 {offsets = [0, 8], sizes = [8, 8], strides = [1, 1]} : vector<8x32xf32> to vector<8x8xf32>
    %cst_19 = arith.constant dense<0.000000e+00> : vector<8x8xf32>
    %38 = tpu.matmul %35, %36, %cst_19 {dimension_numbers = #tpu.dot_dimension_numbers<[1], [1], [0], [0], [0, 0, 1, 0], [], []>} : vector<8x8xf32>, vector<8x8xf32>, vector<8x8xf32> -> vector<8x8xf32>
    %cst_20 = arith.constant dense<0xFF800000> : vector<8xf32>
    %39 = vector.multi_reduction <maximumf>, %38, %cst_20 [1] : vector<8x8xf32> to vector<8xf32>
    %40 = vector.shape_cast %39 : vector<8xf32> to vector<8x1xf32>
    %41 = vector.broadcast %40 : vector<8x1xf32> to vector<8x8xf32>
    %42 = arith.subf %38, %41 : vector<8x8xf32>
    %43 = math.exp %42 : vector<8x8xf32>
    %cst_21 = arith.constant dense<0.000000e+00> : vector<8xf32>
    %44 = vector.multi_reduction <add>, %43, %cst_21 [1] : vector<8x8xf32> to vector<8xf32>
    %45 = vector.shape_cast %44 : vector<8xf32> to vector<8x1xf32>
    %cst_22 = arith.constant dense<0.000000e+00> : vector<8x8xf32>
    %46 = tpu.matmul %43, %37, %cst_22 {dimension_numbers = #tpu.dot_dimension_numbers<[1], [0], [0], [1], [0, 0, 1, 1], [], []>} : vector<8x8xf32>, vector<8x8xf32>, vector<8x8xf32> -> vector<8x8xf32>
    %47 = tpu.reciprocal %45 {approx = true} : vector<8x1xf32> -> vector<8x1xf32>
    %48 = vector.broadcast %47 : vector<8x1xf32> to vector<8x8xf32>
    %49 = arith.mulf %46, %48 : vector<8x8xf32>
    %c0_23 = arith.constant 0 : index
    %c0_24 = arith.constant 0 : index
    %c8 = arith.constant 8 : index
    %50 = vector.load %arg10[%c0_23, %c0_24, %c8] : memref<1x8x32xf32, #tpu.memory_space<vmem>>, vector<1x8x8xf32>
    %51 = vector.shape_cast %50 : vector<1x8x8xf32> to vector<8x8xf32>
    %52 = vector.shape_cast %49 : vector<8x8xf32> to vector<1x8x8xf32>
    tpu.vector_store %arg10[%c0_23, %c0_24, %c8], %52 {strides = array<i32>} : memref<1x8x32xf32, #tpu.memory_space<vmem>>, vector<1x8x8xf32>,
    %53 = vector.extract_strided_slice %14 {offsets = [0, 16], sizes = [8, 8], strides = [1, 1]} : vector<8x32xf32> to vector<8x8xf32>
    %54 = vector.extract_strided_slice %15 {offsets = [0, 16], sizes = [8, 8], strides = [1, 1]} : vector<8x32xf32> to vector<8x8xf32>
    %55 = vector.extract_strided_slice %16 {offsets = [0, 16], sizes = [8, 8], strides = [1, 1]} : vector<8x32xf32> to vector<8x8xf32>
    %cst_25 = arith.constant dense<0.000000e+00> : vector<8x8xf32>
    %56 = tpu.matmul %53, %54, %cst_25 {dimension_numbers = #tpu.dot_dimension_numbers<[1], [1], [0], [0], [0, 0, 1, 0], [], []>} : vector<8x8xf32>, vector<8x8xf32>, vector<8x8xf32> -> vector<8x8xf32>
    %cst_26 = arith.constant dense<0xFF800000> : vector<8xf32>
    %57 = vector.multi_reduction <maximumf>, %56, %cst_26 [1] : vector<8x8xf32> to vector<8xf32>
    %58 = vector.shape_cast %57 : vector<8xf32> to vector<8x1xf32>
    %59 = vector.broadcast %58 : vector<8x1xf32> to vector<8x8xf32>
    %60 = arith.subf %56, %59 : vector<8x8xf32>
    %61 = math.exp %60 : vector<8x8xf32>
    %cst_27 = arith.constant dense<0.000000e+00> : vector<8xf32>
    %62 = vector.multi_reduction <add>, %61, %cst_27 [1] : vector<8x8xf32> to vector<8xf32>
    %63 = vector.shape_cast %62 : vector<8xf32> to vector<8x1xf32>
    %cst_28 = arith.constant dense<0.000000e+00> : vector<8x8xf32>
    %64 = tpu.matmul %61, %55, %cst_28 {dimension_numbers = #tpu.dot_dimension_numbers<[1], [0], [0], [1], [0, 0, 1, 1], [], []>} : vector<8x8xf32>, vector<8x8xf32>, vector<8x8xf32> -> vector<8x8xf32>
    %65 = tpu.reciprocal %63 {approx = true} : vector<8x1xf32> -> vector<8x1xf32>
    %66 = vector.broadcast %65 : vector<8x1xf32> to vector<8x8xf32>
    %67 = arith.mulf %64, %66 : vector<8x8xf32>
    %c0_29 = arith.constant 0 : index
    %c0_30 = arith.constant 0 : index
    %c16 = arith.constant 16 : index
    %68 = vector.load %arg10[%c0_29, %c0_30, %c16] : memref<1x8x32xf32, #tpu.memory_space<vmem>>, vector<1x8x8xf32>
    %69 = vector.shape_cast %68 : vector<1x8x8xf32> to vector<8x8xf32>
    %70 = vector.shape_cast %67 : vector<8x8xf32> to vector<1x8x8xf32>
    tpu.vector_store %arg10[%c0_29, %c0_30, %c16], %70 {strides = array<i32>} : memref<1x8x32xf32, #tpu.memory_space<vmem>>, vector<1x8x8xf32>,
    %71 = vector.extract_strided_slice %14 {offsets = [0, 24], sizes = [8, 8], strides = [1, 1]} : vector<8x32xf32> to vector<8x8xf32>
    %72 = vector.extract_strided_slice %15 {offsets = [0, 24], sizes = [8, 8], strides = [1, 1]} : vector<8x32xf32> to vector<8x8xf32>
    %73 = vector.extract_strided_slice %16 {offsets = [0, 24], sizes = [8, 8], strides = [1, 1]} : vector<8x32xf32> to vector<8x8xf32>
    %cst_31 = arith.constant dense<0.000000e+00> : vector<8x8xf32>
    %74 = tpu.matmul %71, %72, %cst_31 {dimension_numbers = #tpu.dot_dimension_numbers<[1], [1], [0], [0], [0, 0, 1, 0], [], []>} : vector<8x8xf32>, vector<8x8xf32>, vector<8x8xf32> -> vector<8x8xf32>
    %cst_32 = arith.constant dense<0xFF800000> : vector<8xf32>
    %75 = vector.multi_reduction <maximumf>, %74, %cst_32 [1] : vector<8x8xf32> to vector<8xf32>
    %76 = vector.shape_cast %75 : vector<8xf32> to vector<8x1xf32>
    %77 = vector.broadcast %76 : vector<8x1xf32> to vector<8x8xf32>
    %78 = arith.subf %74, %77 : vector<8x8xf32>
    %79 = math.exp %78 : vector<8x8xf32>
    %cst_33 = arith.constant dense<0.000000e+00> : vector<8xf32>
    %80 = vector.multi_reduction <add>, %79, %cst_33 [1] : vector<8x8xf32> to vector<8xf32>
    %81 = vector.shape_cast %80 : vector<8xf32> to vector<8x1xf32>
    %cst_34 = arith.constant dense<0.000000e+00> : vector<8x8xf32>
    %82 = tpu.matmul %79, %73, %cst_34 {dimension_numbers = #tpu.dot_dimension_numbers<[1], [0], [0], [1], [0, 0, 1, 1], [], []>} : vector<8x8xf32>, vector<8x8xf32>, vector<8x8xf32> -> vector<8x8xf32>
    %83 = tpu.reciprocal %81 {approx = true} : vector<8x1xf32> -> vector<8x1xf32>
    %84 = vector.broadcast %83 : vector<8x1xf32> to vector<8x8xf32>
    %85 = arith.mulf %82, %84 : vector<8x8xf32>
    %c0_35 = arith.constant 0 : index
    %c0_36 = arith.constant 0 : index
    %c24 = arith.constant 24 : index
    %86 = vector.load %arg10[%c0_35, %c0_36, %c24] : memref<1x8x32xf32, #tpu.memory_space<vmem>>, vector<1x8x8xf32>
    %87 = vector.shape_cast %86 : vector<1x8x8xf32> to vector<8x8xf32>
    %88 = vector.shape_cast %85 : vector<8x8xf32> to vector<1x8x8xf32>
    tpu.vector_store %arg10[%c0_35, %c0_36, %c24], %88 {strides = array<i32>} : memref<1x8x32xf32, #tpu.memory_space<vmem>>, vector<1x8x8xf32>,
    return
  }
  func.func @transform_0(%arg0: i32, %arg1: i32, %arg2: i32) -> (i32, i32, i32) {
    %c0_i32 = arith.constant 0 : i32
    %c0_i32_0 = arith.constant 0 : i32
    %c0_i32_1 = arith.constant 0 : i32
    return %arg0, %c0_i32, %c0_i32_0 : i32, i32, i32
  }
  func.func @transform_1(%arg0: i32, %arg1: i32, %arg2: i32) -> (i32, i32, i32) {
    %c0_i32 = arith.constant 0 : i32
    %c0_i32_0 = arith.constant 0 : i32
    %c0_i32_1 = arith.constant 0 : i32
    return %arg1, %c0_i32, %c0_i32_0 : i32, i32, i32
  }
  func.func @transform_2(%arg0: i32, %arg1: i32, %arg2: i32) -> (i32, i32, i32) {
    %c0_i32 = arith.constant 0 : i32
    %c0_i32_0 = arith.constant 0 : i32
    %c0_i32_1 = arith.constant 0 : i32
    return %arg1, %c0_i32, %c0_i32_0 : i32, i32, i32
  }
  func.func @transform_3(%arg0: i32, %arg1: i32, %arg2: i32) -> (i32, i32, i32) {
    %c0_i32 = arith.constant 0 : i32
    %c0_i32_0 = arith.constant 0 : i32
    %c0_i32_1 = arith.constant 0 : i32
    return %arg1, %c0_i32, %c0_i32_0 : i32, i32, i32
  }
  func.func @transform_4(%arg0: i32, %arg1: i32, %arg2: i32) -> (i32, i32, i32) {
    %c0_i32 = arith.constant 0 : i32
    %c0_i32_0 = arith.constant 0 : i32
    %c0_i32_1 = arith.constant 0 : i32
    return %arg1, %c0_i32, %c0_i32_0 : i32, i32, i32
  }
  func.func @transform_5(%arg0: i32, %arg1: i32, %arg2: i32) -> (i32, i32, i32) {
    %c0_i32 = arith.constant 0 : i32
    %c0_i32_0 = arith.constant 0 : i32
    %c0_i32_1 = arith.constant 0 : i32
    return %arg1, %c0_i32, %c0_i32_0 : i32, i32, i32
  }
  func.func @transform_6(%arg0: i32, %arg1: i32, %arg2: i32) -> (i32, i32, i32) {
    %c0_i32 = arith.constant 0 : i32
    %c0_i32_0 = arith.constant 0 : i32
    %c0_i32_1 = arith.constant 0 : i32
    return %arg1, %c0_i32, %c0_i32_0 : i32, i32, i32
  }
  func.func @transform_7(%arg0: i32, %arg1: i32, %arg2: i32) -> (i32, i32, i32) {
    %c0_i32 = arith.constant 0 : i32
    return %arg0, %arg2, %arg1 : i32, i32, i32
  }
}

</mosaic_0001>

<llo_original>
// kernel: tpu_custom_call.1
$region0: #{tpu_custom_call.1}
  #allocation0 [shape = 'u32[]', space=smem, size = 0x4, offset = 0x4, fixed_abs, tag = 'smem constant byte address 0x4 - core index']
  #allocation1 [shape = 'u32[144,128]{1,0:T(1,128)}', space=vmem, size = 0x12000, scoped, tag = 'internal scratch']
  #allocation2 [shape = 'f32[8,32]{1,0:T(8,128)}', space=vmem, size = 0x1000, scoped, tag = 'scratch operand']
  #allocation3 [shape = 'f32[8,32]{1,0:T(8,128)}', space=vmem, size = 0x1000, scoped, tag = 'scratch operand']
  %s0 = inlined_call_operand.hbm [shape: f32[2,8,32], index: 0, kind: input, shape index: {}]
  %s1 = inlined_call_operand.hbm [shape: f32[1,32,32], index: 1, kind: input, shape index: {}]
  %s2 = inlined_call_operand.hbm [shape: f32[1,32,32], index: 2, kind: input, shape index: {}]
  %s3 = inlined_call_operand.hbm [shape: f32[1,32,32], index: 3, kind: input, shape index: {}]
  %s4 = inlined_call_operand.vmem [shape: f32[1,1,32], index: 4, kind: input, shape index: {}]
  %s5 = inlined_call_operand.vmem [shape: f32[1,1,32], index: 5, kind: input, shape index: {}]
  %s6 = inlined_call_operand.vmem [shape: f32[1,1,32], index: 6, kind: input, shape index: {}]
  %s7 = inlined_call_operand.hbm [shape: f32[2,8,32], index: 7, kind: output, shape index: {}]
  %s8 = sld [smem:[#allocation0]]
  $region81: #{tpu_custom_call.1} parent=0
    _
  %s10 = ssub.s32 1, %s8
  %s11 = scalar_select 0, %s10, %s8
  $region1: #{tpu_custom_call.1} parent=0
    #allocation4 [shape = 'u8[8192]{0}', space=vmem, size = 0x2000, scoped, tag = 'input window, operand 0']
    #allocation5 [shape = 's32[2]{0}', space=sflag, size = 0x8, scoped, tag = 'scoped memory for tpu_custom_call.1']
    #allocation6 [shape = 's32[2]{0}', space=sflag, size = 0x8, scoped, tag = 'scoped memory for tpu_custom_call.1']
    #allocation7 [shape = 'u8[16384]{0}', space=vmem, size = 0x4000, scoped, tag = 'input window, operand 1, single buffered']
    #allocation8 [shape = 's32[1]{0}', space=sflag, size = 0x4, scoped, tag = 'scoped memory for tpu_custom_call.1']
    #allocation9 [shape = 'u8[16384]{0}', space=vmem, size = 0x4000, scoped, tag = 'input window, operand 2, single buffered']
    #allocation10 [shape = 'u8[16384]{0}', space=vmem, size = 0x4000, scoped, tag = 'input window, operand 3, single buffered']
    #allocation11 [shape = 's32[1]{0}', space=sflag, size = 0x4, scoped, tag = 'scoped memory for tpu_custom_call.1']
    #allocation12 [shape = 'u8[8192]{0}', space=vmem, size = 0x2000, scoped, tag = 'output window, operand 0']
    %12 = vsyncpa [#allocation5], 0
    %s13 = scalar_lea.sflag [#allocation5], 1
    %14 = vsyncpa %s13, 0
    %15 = vsyncpa [#allocation8], 0
    %16 = vsyncpa [#allocation11], 0
    %17 = vsyncpa [#allocation6], 0
    %s18 = scalar_lea.sflag [#allocation6], 1
    %19 = vsyncpa %s18, 0
    loop: start=0, step=1, limit=4
    $region2: #{tpu_custom_call.1} parent=1 // loop_pre_header
      _
    $region3: #{tpu_custom_call.1} parent=1 // loop_header
      %s21 = sphi 0, %s25
      %p22 = scmp.ge.s32.totalorder %s21, 4
      %s28 = sphi 0, %s47
      %s29 = sphi 0, %s43
      %s30 = sphi 0, %s39
      %s31 = sphi 0, %s28
      %s32 = sphi 0, %s29
      %s33 = sphi 0, %s30
      %s34 = sphi 0, %s31
      %s35 = sphi 0, %s32
      %s36 = sphi 0, %s33
      %s50 = sphi 0, %s52
      %s53 = sphi 0, %s50
      %s54 = sphi 0, %s53
      %s70 = sphi 0, %s54
      %s76 = sphi 0, %s78
      %s79 = sphi 0, %s76
      %s80 = sphi 0, %s79
      %s96 = sphi 0, %s80
      %s102 = sphi 0, %s104
      %s105 = sphi 0, %s102
      %s106 = sphi 0, %s105
      %s122 = sphi 0, %s106
      %s128 = sphi 0, %s130
      %s131 = sphi 0, %s128
      %s132 = sphi 0, %s131
      %s148 = sphi 0, %s132
      %s154 = sphi 0, %s156
      %s157 = sphi 0, %s154
      %s158 = sphi 0, %s157
      %s174 = sphi 0, %s158
      %s180 = sphi 0, %s182
      %s183 = sphi 0, %s180
      %s184 = sphi 0, %s183
      %s200 = sphi 0, %s184
      %s206 = sphi 0, %s208
      %s209 = sphi 0, %s206
      %s210 = sphi 0, %s209
      %s226 = sphi 0, %s210
      %s236 = sphi 0, %s238
      %s239 = sphi 0, %s236
      %s240 = sphi 0, %s239
      %s256 = sphi 0, %s240
    $region4: #{tpu_custom_call.1} parent=1 // loop_header_branch
      %24 = sbr.rel (%p22) target = $region8
    $region5: #{tpu_custom_call.1} parent=1 // loop_body
      %s26 = ssub.s32 %s21, 1
      %s27 = ssub.s32 %s21, 2
      %s37 = sadd.s32 1, %s30
      %p38 = scmp.ge.s32.totalorder %s37, 1
      %s39 = scalar_select %p38, 0, %s37
      %s40 = sadd.s32 1, %s29
      %s41 = scalar_select %p38, %s40, %s29
      %p42 = scmp.ge.s32.totalorder %s41, 1
      %s43 = scalar_select %p42, 0, %s41
      %s44 = sadd.s32 1, %s28
      %s45 = scalar_select %p42, %s44, %s28
      %p46 = scmp.ge.s32.totalorder %s45, 2
      %s47 = scalar_select %p46, 0, %s45
      %s48 = ssub.s32 %s28, %s47
      %p49 = scmp.eq.s32.totalorder %s48, 0
      %s51 = sadd.s32 %s50, 1
      %s52 = scalar_select %p49, %s50, %s51
      %p55 = pneg %p49
      %p56 = scmp.eq.s32.totalorder %s21, 1
      %p57 = por %p55, %p56
      %p58 = scmp.ne.s32.totalorder %s50, %s53
      %p59 = scmp.eq.s32.totalorder %s21, 0
      %p60 = por %p58, %p59
      %p61 = scmp.ne.s32.totalorder %s50, %s53
      %p62 = scmp.eq.s32.totalorder %s26, 1
      %p63 = por %p61, %p62
      %p64 = scmp.ne.s32.totalorder %s53, %s54
      %p65 = scmp.eq.s32.totalorder %s26, 0
      %p66 = por %p64, %p65
      %p67 = scmp.ne.s32.totalorder %s53, %s54
      %p68 = scmp.eq.s32.totalorder %s27, 1
      %p69 = por %p67, %p68
      %p71 = scmp.ne.s32.totalorder %s54, %s70
      %p72 = scmp.eq.s32.totalorder %s27, 0
      %p73 = por %p71, %p72
      %s74 = ssub.s32 %s29, %s43
      %p75 = scmp.eq.s32.totalorder %s74, 0
      %s77 = sadd.s32 %s76, 1
      %s78 = scalar_select %p75, %s76, %s77
      %p81 = pneg %p75
      %p82 = scmp.eq.s32.totalorder %s21, 1
      %p83 = por %p81, %p82
      %p84 = scmp.ne.s32.totalorder %s76, %s79
      %p85 = scmp.eq.s32.totalorder %s21, 0
      %p86 = por %p84, %p85
      %p87 = scmp.ne.s32.totalorder %s76, %s79
      %p88 = scmp.eq.s32.totalorder %s26, 1
      %p89 = por %p87, %p88
      %p90 = scmp.ne.s32.totalorder %s79, %s80
      %p91 = scmp.eq.s32.totalorder %s26, 0
      %p92 = por %p90, %p91
      %p93 = scmp.ne.s32.totalorder %s79, %s80
      %p94 = scmp.eq.s32.totalorder %s27, 1
      %p95 = por %p93, %p94
      %p97 = scmp.ne.s32.totalorder %s80, %s96
      %p98 = scmp.eq.s32.totalorder %s27, 0
      %p99 = por %p97, %p98
      %s100 = ssub.s32 %s29, %s43
      %p101 = scmp.eq.s32.totalorder %s100, 0
      %s103 = sadd.s32 %s102, 1
      %s104 = scalar_select %p101, %s102, %s103
      %p107 = pneg %p101
      %p108 = scmp.eq.s32.totalorder %s21, 1
      %p109 = por %p107, %p108
      %p110 = scmp.ne.s32.totalorder %s102, %s105
      %p111 = scmp.eq.s32.totalorder %s21, 0
      %p112 = por %p110, %p111
      %p113 = scmp.ne.s32.totalorder %s102, %s105
      %p114 = scmp.eq.s32.totalorder %s26, 1
      %p115 = por %p113, %p114
      %p116 = scmp.ne.s32.totalorder %s105, %s106
      %p117 = scmp.eq.s32.totalorder %s26, 0
      %p118 = por %p116, %p117
      %p119 = scmp.ne.s32.totalorder %s105, %s106
      %p120 = scmp.eq.s32.totalorder %s27, 1
      %p121 = por %p119, %p120
      %p123 = scmp.ne.s32.totalorder %s106, %s122
      %p124 = scmp.eq.s32.totalorder %s27, 0
      %p125 = por %p123, %p124
      %s126 = ssub.s32 %s29, %s43
      %p127 = scmp.eq.s32.totalorder %s126, 0
      %s129 = sadd.s32 %s128, 1
      %s130 = scalar_select %p127, %s128, %s129
      %p133 = pneg %p127
      %p134 = scmp.eq.s32.totalorder %s21, 1
      %p135 = por %p133, %p134
      %p136 = scmp.ne.s32.totalorder %s128, %s131
      %p137 = scmp.eq.s32.totalorder %s21, 0
      %p138 = por %p136, %p137
      %p139 = scmp.ne.s32.totalorder %s128, %s131
      %p140 = scmp.eq.s32.totalorder %s26, 1
      %p141 = por %p139, %p140
      %p142 = scmp.ne.s32.totalorder %s131, %s132
      %p143 = scmp.eq.s32.totalorder %s26, 0
      %p144 = por %p142, %p143
      %p145 = scmp.ne.s32.totalorder %s131, %s132
      %p146 = scmp.eq.s32.totalorder %s27, 1
      %p147 = por %p145, %p146
      %p149 = scmp.ne.s32.totalorder %s132, %s148
      %p150 = scmp.eq.s32.totalorder %s27, 0
      %p151 = por %p149, %p150
      %s152 = ssub.s32 %s29, %s43
      %p153 = scmp.eq.s32.totalorder %s152, 0
      %s155 = sadd.s32 %s154, 1
      %s156 = scalar_select %p153, %s154, %s155
      %p159 = pneg %p153
      %p160 = scmp.eq.s32.totalorder %s21, 1
      %p161 = por %p159, %p160
      %p162 = scmp.ne.s32.totalorder %s154, %s157
      %p163 = scmp.eq.s32.totalorder %s21, 0
      %p164 = por %p162, %p163
      %p165 = scmp.ne.s32.totalorder %s154, %s157
      %p166 = scmp.eq.s32.totalorder %s26, 1
      %p167 = por %p165, %p166
      %p168 = scmp.ne.s32.totalorder %s157, %s158
      %p169 = scmp.eq.s32.totalorder %s26, 0
      %p170 = por %p168, %p169
      %p171 = scmp.ne.s32.totalorder %s157, %s158
      %p172 = scmp.eq.s32.totalorder %s27, 1
      %p173 = por %p171, %p172
      %p175 = scmp.ne.s32.totalorder %s158, %s174
      %p176 = scmp.eq.s32.totalorder %s27, 0
      %p177 = por %p175, %p176
      %s178 = ssub.s32 %s29, %s43
      %p179 = scmp.eq.s32.totalorder %s178, 0
      %s181 = sadd.s32 %s180, 1
      %s182 = scalar_select %p179, %s180, %s181
      %p185 = pneg %p179
      %p186 = scmp.eq.s32.totalorder %s21, 1
      %p187 = por %p185, %p186
      %p188 = scmp.ne.s32.totalorder %s180, %s183
      %p189 = scmp.eq.s32.totalorder %s21, 0
      %p190 = por %p188, %p189
      %p191 = scmp.ne.s32.totalorder %s180, %s183
      %p192 = scmp.eq.s32.totalorder %s26, 1
      %p193 = por %p191, %p192
      %p194 = scmp.ne.s32.totalorder %s183, %s184
      %p195 = scmp.eq.s32.totalorder %s26, 0
      %p196 = por %p194, %p195
      %p197 = scmp.ne.s32.totalorder %s183, %s184
      %p198 = scmp.eq.s32.totalorder %s27, 1
      %p199 = por %p197, %p198
      %p201 = scmp.ne.s32.totalorder %s184, %s200
      %p202 = scmp.eq.s32.totalorder %s27, 0
      %p203 = por %p201, %p202
      %s204 = ssub.s32 %s29, %s43
      %p205 = scmp.eq.s32.totalorder %s204, 0
      %s207 = sadd.s32 %s206, 1
      %s208 = scalar_select %p205, %s206, %s207
      %p211 = pneg %p205
      %p212 = scmp.eq.s32.totalorder %s21, 1
      %p213 = por %p211, %p212
      %p214 = scmp.ne.s32.totalorder %s206, %s209
      %p215 = scmp.eq.s32.totalorder %s21, 0
      %p216 = por %p214, %p215
      %p217 = scmp.ne.s32.totalorder %s206, %s209
      %p218 = scmp.eq.s32.totalorder %s26, 1
      %p219 = por %p217, %p218
      %p220 = scmp.ne.s32.totalorder %s209, %s210
      %p221 = scmp.eq.s32.totalorder %s26, 0
      %p222 = por %p220, %p221
      %p223 = scmp.ne.s32.totalorder %s209, %s210
      %p224 = scmp.eq.s32.totalorder %s27, 1
      %p225 = por %p223, %p224
      %p227 = scmp.ne.s32.totalorder %s210, %s226
      %p228 = scmp.eq.s32.totalorder %s27, 0
      %p229 = por %p227, %p228
      %s230 = ssub.s32 %s28, %s47
      %s231 = ssub.s32 %s30, %s39
      %s232 = sor.u32 %s230, %s231
      %s233 = ssub.s32 %s29, %s43
      %s234 = sor.u32 %s232, %s233
      %p235 = scmp.eq.s32.totalorder %s234, 0
      %s237 = sadd.s32 %s236, 1
      %s238 = scalar_select %p235, %s236, %s237
      %p241 = pneg %p235
      %p242 = scmp.eq.s32.totalorder %s21, 1
      %p243 = por %p241, %p242
      %p244 = scmp.ne.s32.totalorder %s236, %s239
      %p245 = scmp.eq.s32.totalorder %s21, 0
      %p246 = por %p244, %p245
      %p247 = scmp.ne.s32.totalorder %s236, %s239
      %p248 = scmp.eq.s32.totalorder %s26, 1
      %p249 = por %p247, %p248
      %p250 = scmp.ne.s32.totalorder %s239, %s240
      %p251 = scmp.eq.s32.totalorder %s26, 0
      %p252 = por %p250, %p251
      %p253 = scmp.ne.s32.totalorder %s239, %s240
      %p254 = scmp.eq.s32.totalorder %s27, 1
      %p255 = por %p253, %p254
      %p257 = scmp.ne.s32.totalorder %s240, %s256
      %p258 = scmp.eq.s32.totalorder %s27, 0
      %p259 = por %p257, %p258
      %p260 = scmp.le.s32.totalorder 1, %s21
      %p261 = scmp.lt.s32.totalorder %s21, 3
      %p262 = pnand %p260, %p261
      %p263 = pneg %p262
      // Predicated region
      $region9: #{tpu_custom_call.1} parent=5 // pred_check
        _
      $region10: #{tpu_custom_call.1} parent=5 // pred_check_branch
        %265 = sbr.rel (%p262) target = $region12
      $region11: #{tpu_custom_call.1} parent=5 // pred_region
        %s266 = ssub.s32 %s21, 1
        // Predicated region
        $region13: #{tpu_custom_call.1} parent=11 // pred_check
          %p267 = pneg %p92
        $region14: #{tpu_custom_call.1} parent=11 // pred_check_branch
          %269 = sbr.rel (%p267) target = $region16
        $region15: #{tpu_custom_call.1} parent=11 // pred_region
          %s271 = ssub.s32 512, 512
          %272 = vsyncadd [#allocation8], %s271
          %s273 = smul.addr %s32, 4
          %s274 = smul.addr %s273, 128
          %s275 = scalar_lea.hbm %s1, %s274
          %s276 = sshll.u32 [#allocation7], 4
          %s277 = int_to_ptr.vmem [resolvable:$true] %s276
          %282 = dma.hbm_to_vmem [thread:$0]  %s275, 512, %s277, [#allocation8], 128, 128, 8
        $region16: #{tpu_custom_call.1} parent=11 // pred_fallthru
          _
        // Predicated region
        $region17: #{tpu_custom_call.1} parent=11 // pred_check
          %p283 = pneg %p118
        $region18: #{tpu_custom_call.1} parent=11 // pred_check_branch
          %285 = sbr.rel (%p283) target = $region20
        $region19: #{tpu_custom_call.1} parent=11 // pred_region
          %s287 = ssub.s32 512, 512
          %288 = vsyncadd [#allocation8], %s287
          %s289 = smul.addr %s32, 4
          %s290 = smul.addr %s289, 128
          %s291 = scalar_lea.hbm %s2, %s290
          %s292 = sshll.u32 [#allocation9], 4
          %s293 = int_to_ptr.vmem [resolvable:$true] %s292
          %298 = dma.hbm_to_vmem [thread:$0]  %s291, 512, %s293, [#allocation8], 128, 128, 8
        $region20: #{tpu_custom_call.1} parent=11 // pred_fallthru
          _
        // Predicated region
        $region21: #{tpu_custom_call.1} parent=11 // pred_check
          %p299 = pneg %p144
        $region22: #{tpu_custom_call.1} parent=11 // pred_check_branch
          %301 = sbr.rel (%p299) target = $region24
        $region23: #{tpu_custom_call.1} parent=11 // pred_region
          %s303 = ssub.s32 512, 512
          %304 = vsyncadd [#allocation11], %s303
          %s305 = smul.addr %s32, 4
          %s306 = smul.addr %s305, 128
          %s307 = scalar_lea.hbm %s3, %s306
          %s308 = sshll.u32 [#allocation10], 4
          %s309 = int_to_ptr.vmem [resolvable:$true] %s308
          %314 = dma.hbm_to_vmem [thread:$0]  %s307, 512, %s309, [#allocation11], 128, 128, 8
        $region24: #{tpu_custom_call.1} parent=11 // pred_fallthru
          _
        // Predicated region
        $region25: #{tpu_custom_call.1} parent=11 // pred_check
          %p315 = pneg %p170
        $region26: #{tpu_custom_call.1} parent=11 // pred_check_branch
          %317 = sbr.rel (%p315) target = $region28
        $region27: #{tpu_custom_call.1} parent=11 // pred_region
          %p318 = scmp.lt.s32.totalorder %s32, 0
          %s319 = scalar_select %p318, %s32, 0
          %s320 = scalar_lea.vmem %s4, %s319
        $region28: #{tpu_custom_call.1} parent=11 // pred_fallthru
          _
        // Predicated region
        $region29: #{tpu_custom_call.1} parent=11 // pred_check
          %p321 = pneg %p196
        $region30: #{tpu_custom_call.1} parent=11 // pred_check_branch
          %323 = sbr.rel (%p321) target = $region32
        $region31: #{tpu_custom_call.1} parent=11 // pred_region
          %p324 = scmp.lt.s32.totalorder %s32, 0
          %s325 = scalar_select %p324, %s32, 0
          %s326 = scalar_lea.vmem %s5, %s325
        $region32: #{tpu_custom_call.1} parent=11 // pred_fallthru
          _
        // Predicated region
        $region33: #{tpu_custom_call.1} parent=11 // pred_check
          %p327 = pneg %p222
        $region34: #{tpu_custom_call.1} parent=11 // pred_check_branch
          %329 = sbr.rel (%p327) target = $region36
        $region35: #{tpu_custom_call.1} parent=11 // pred_region
          %p330 = scmp.lt.s32.totalorder %s32, 0
          %s331 = scalar_select %p330, %s32, 0
          %s332 = scalar_lea.vmem %s6, %s331
        $region36: #{tpu_custom_call.1} parent=11 // pred_fallthru
          _
      $region12: #{tpu_custom_call.1} parent=5 // pred_fallthru
        _
      %p333 = scmp.lt.s32.totalorder %s21, 2
      // Predicated region
      $region37: #{tpu_custom_call.1} parent=5 // pred_check
        %p334 = pneg %p333
      $region38: #{tpu_custom_call.1} parent=5 // pred_check_branch
        %336 = sbr.rel (%p334) target = $region40
      $region39: #{tpu_custom_call.1} parent=5 // pred_region
        // Predicated region
        $region41: #{tpu_custom_call.1} parent=39 // pred_check
          %p337 = pneg %p60
        $region42: #{tpu_custom_call.1} parent=39 // pred_check_branch
          %339 = sbr.rel (%p337) target = $region44
        $region43: #{tpu_custom_call.1} parent=39 // pred_region
          %s340 = sand.u32 %s50, 1
          %s341 = scalar_lea.sflag [#allocation5], %s340
          %s342 = sand.u32 %s50, 1
          %s343 = smul.addr %s342, 8
          %s344 = scalar_lea.vmem [#allocation4], %s343
          %s346 = ssub.s32 128, 128
          %347 = vsyncadd %s341, %s346
          %s348 = smul.addr %s28, 128
          %s349 = scalar_lea.hbm %s0, %s348
          %s351 = sshll.u32 %s344, 4
          %s352 = int_to_ptr.vmem [resolvable:$true] %s351
          %354 = dma.hbm_to_vmem [thread:$0]  %s349, 128, %s352, %s341
        $region44: #{tpu_custom_call.1} parent=39 // pred_fallthru
          _
      $region40: #{tpu_custom_call.1} parent=5 // pred_fallthru
        _
      %p355 = scmp.le.s32.totalorder 1, %s21
      %p356 = scmp.lt.s32.totalorder %s21, 3
      %p357 = pnand %p355, %p356
      %p358 = pneg %p357
      // Predicated region
      $region45: #{tpu_custom_call.1} parent=5 // pred_check
        _
      $region46: #{tpu_custom_call.1} parent=5 // pred_check_branch
        %360 = sbr.rel (%p357) target = $region48
      $region47: #{tpu_custom_call.1} parent=5 // pred_region
        %s361 = ssub.s32 %s21, 1
        %s362 = sand.u32 %s53, 1
        %s363 = scalar_lea.sflag [#allocation5], %s362
        %s364 = sand.u32 %s53, 1
        %s365 = smul.addr %s364, 8
        %s366 = scalar_lea.vmem [#allocation4], %s365
        // Predicated region
        $region49: #{tpu_custom_call.1} parent=47 // pred_check
          %p367 = pneg %p66
        $region50: #{tpu_custom_call.1} parent=47 // pred_check_branch
          %369 = sbr.rel (%p367) target = $region52
        $region51: #{tpu_custom_call.1} parent=47 // pred_region
          %370 = dma.done %s363, 128
        $region52: #{tpu_custom_call.1} parent=47 // pred_fallthru
          _
        // Predicated region
        $region53: #{tpu_custom_call.1} parent=47 // pred_check
          %p371 = pneg %p92
        $region54: #{tpu_custom_call.1} parent=47 // pred_check_branch
          %373 = sbr.rel (%p371) target = $region56
        $region55: #{tpu_custom_call.1} parent=47 // pred_region
          %374 = dma.done [#allocation8], 512
        $region56: #{tpu_custom_call.1} parent=47 // pred_fallthru
          _
        // Predicated region
        $region57: #{tpu_custom_call.1} parent=47 // pred_check
          %p375 = pneg %p118
        $region58: #{tpu_custom_call.1} parent=47 // pred_check_branch
          %377 = sbr.rel (%p375) target = $region60
        $region59: #{tpu_custom_call.1} parent=47 // pred_region
          %378 = dma.done [#allocation8], 512
        $region60: #{tpu_custom_call.1} parent=47 // pred_fallthru
          _
        // Predicated region
        $region61: #{tpu_custom_call.1} parent=47 // pred_check
          %p379 = pneg %p144
        $region62: #{tpu_custom_call.1} parent=47 // pred_check_branch
          %381 = sbr.rel (%p379) target = $region64
        $region63: #{tpu_custom_call.1} parent=47 // pred_region
          %382 = dma.done [#allocation11], 512
        $region64: #{tpu_custom_call.1} parent=47 // pred_fallthru
          _
        %s383 = sand.u32 %s53, 1
        %s384 = scalar_lea.sflag [#allocation5], %s383
        %s385 = sand.u32 %s53, 1
        %s386 = smul.addr %s385, 8
        %s387 = scalar_lea.vmem [#allocation4], %s386
        %p388 = pneg %p66
        %p389 = pneg %p63
        %p390 = pneg %p92
        %p391 = pneg %p89
        %p392 = pneg %p118
        %p393 = pneg %p115
        %p394 = pneg %p144
        %p395 = pneg %p141
        %p396 = scmp.lt.s32.totalorder %s32, 0
        %s397 = scalar_select %p396, %s32, 0
        %s398 = scalar_lea.vmem %s4, %s397
        %p399 = pneg %p170
        %p400 = pneg %p167
        %p401 = scmp.lt.s32.totalorder %s32, 0
        %s402 = scalar_select %p401, %s32, 0
        %s403 = scalar_lea.vmem %s5, %s402
        %p404 = pneg %p196
        %p405 = pneg %p193
        %p406 = scmp.lt.s32.totalorder %s32, 0
        %s407 = scalar_select %p406, %s32, 0
        %s408 = scalar_lea.vmem %s6, %s407
        %p409 = pneg %p222
        %p410 = pneg %p219
        %p411 = pneg %p252
        %p412 = pneg %p249
        %s413 = sand.u32 %s239, 1
        %s414 = scalar_lea.sflag [#allocation6], %s413
        %s415 = sand.u32 %s239, 1
        %s416 = smul.addr %s415, 8
        %s417 = scalar_lea.vmem [#allocation12], %s416
        %p418 = scmp.lt.s32.totalorder %s32, 0
        %s419 = scalar_select %p418, %s32, 0
        %s420 = scalar_lea.vmem %s4, %s419
        %p421 = scmp.lt.s32.totalorder %s32, 0
        %s422 = scalar_select %p421, %s32, 0
        %s423 = scalar_lea.vmem %s5, %s422
        %p424 = scmp.lt.s32.totalorder %s32, 0
        %s425 = scalar_select %p424, %s32, 0
        %s426 = scalar_lea.vmem %s6, %s425
        %p427 = scmp.eq.s32.totalorder %s33, 0
        // Predicated region
        $region65: #{tpu_custom_call.1} parent=47 // pred_check
          %p428 = pneg %p427
        $region66: #{tpu_custom_call.1} parent=47 // pred_check_branch
          %430 = sbr.rel (%p428) target = $region68
        $region67: #{tpu_custom_call.1} parent=47 // pred_region
          %v431 = vld [vmem:[%s366] sm:$0xff]
          %v432 = vld [vmem:[#allocation9] sm:$0xff]
          %v433 = vld [vmem:[#allocation9 + $0x8] sm:$0xff]
          %v434 = vld [vmem:[#allocation9 + $0x10] sm:$0xff]
          %v435 = vld [vmem:[#allocation9 + $0x18] sm:$0xff]
          %v436 = vld [vmem:[%s423] sm:$0x1]
          %v438 = vlaneseq
          %v439 = vshrl.u32 %v438, 7
          %v440 = vsub.s32 0, %v439
          %v441 = vrot.slane %v436, %v440
          %vm443 = vcmask 261120
          %v445 = vsel %vm443, %v431, 0
          %447 = vmatprep.subr.mxu0 0.0
          %448 = vmatpush1.msra.mxu0 %v432
          %449 = vmatprep.subr.mxu0 0.0
          %450 = vmatpush1.msra.mxu0 %v433
          %451 = vmatprep.subr.mxu0 0.0
          %452 = vmatpush1.msra.mxu0 %v434
          %453 = vmatprep.subr.mxu0 0.0
          %454 = vmatpush1.msra.mxu0 %v435
          %455 = vmatprep.subr.mxu0 0.0
          %456 = vmatpush1.msra.mxu0 0.0
          %457 = vmatprep.subr.mxu0 0.0
          %458 = vmatpush1.msra.mxu0 0.0
          %459 = vmatprep.subr.mxu0 0.0
          %460 = vmatpush1.msra.mxu0 0.0
          %461 = vmatprep.subr.mxu0 0.0
          %462 = vmatpush1.msra.mxu0 0.0
          %463 = vmatprep.subr.mxu0 0.0
          %464 = vmatpush1.msra.mxu0 0.0
          %465 = vmatprep.subr.mxu0 0.0
          %466 = vmatpush1.msra.mxu0 0.0
          %467 = vmatprep.subr.mxu0 0.0
          %468 = vmatpush1.msra.mxu0 0.0
          %469 = vmatprep.subr.mxu0 0.0
          %470 = vmatpush1.msra.mxu0 0.0
          %471 = vmatprep.subr.mxu0 0.0
          %472 = vmatpush1.msra.mxu0 0.0
          %473 = vmatprep.subr.mxu0 0.0
          %474 = vmatpush1.msra.mxu0 0.0
          %475 = vmatprep.subr.mxu0 0.0
          %476 = vmatpush1.msra.mxu0 0.0
          %477 = vmatprep.subr.mxu0 0.0
          %478 = vmatpush1.msra.mxu0 0.0
          %479 = vmatprep.subr.mxu0 0.0
          %480 = vmatpush1.msra.mxu0 0.0
          %481 = vmatprep.subr.mxu0 0.0
          %482 = vmatpush1.msra.mxu0 0.0
          %483 = vmatprep.subr.mxu0 0.0
          %484 = vmatpush1.msra.mxu0 0.0
          %485 = vmatprep.subr.mxu0 0.0
          %486 = vmatpush1.msra.mxu0 0.0
          %487 = vmatprep.subr.mxu0 0.0
          %488 = vmatpush1.msra.mxu0 0.0
          %489 = vmatprep.subr.mxu0 0.0
          %490 = vmatpush1.msra.mxu0 0.0
          %491 = vmatprep.subr.mxu0 0.0
          %492 = vmatpush1.msra.mxu0 0.0
          %493 = vmatprep.subr.mxu0 0.0
          %494 = vmatpush1.msra.mxu0 0.0
          %495 = vmatprep.subr.mxu0 0.0
          %496 = vmatpush1.msra.mxu0 0.0
          %497 = vmatprep.subr.mxu0 0.0
          %498 = vmatpush1.msra.mxu0 0.0
          %499 = vmatprep.subr.mxu0 0.0
          %500 = vmatpush1.msra.mxu0 0.0
          %501 = vmatprep.subr.mxu0 0.0
          %502 = vmatpush1.msra.mxu0 0.0
          %503 = vmatprep.subr.mxu0 0.0
          %504 = vmatpush1.msra.mxu0 0.0
          %505 = vmatprep.subr.mxu0 0.0
          %506 = vmatpush1.msra.mxu0 0.0
          %507 = vmatprep.subr.mxu0 0.0
          %508 = vmatpush1.msra.mxu0 0.0
          %509 = vmatprep.subr.mxu0 0.0
          %510 = vmatpush1.msra.mxu0 0.0
          %511 = vmatprep.mubr.f32.mxu0 0.0
          %512 = vmatmul.mubr.f32.gmra.mrb[0].mxu0 %v445
          %v513 = vpop.f32.mrb[0].mxu0
          %v514 = vadd.f32 %v441, %v513
          %v515 = vpop.f32.mrb[0].mxu0
          %516 = vdwg.mxu0
          %517 = vst.msk [vmem:[#allocation2] sm:$0xff] %vm443, %v514
          %v518 = vld [vmem:[#allocation10] sm:$0xff]
          %v519 = vld [vmem:[#allocation10 + $0x8] sm:$0xff]
          %v520 = vld [vmem:[#allocation10 + $0x10] sm:$0xff]
          %v521 = vld [vmem:[#allocation10 + $0x18] sm:$0xff]
          %v522 = vld [vmem:[%s426] sm:$0x1]
          %v524 = vlaneseq
          %v525 = vshrl.u32 %v524, 7
          %v526 = vsub.s32 0, %v525
          %v527 = vrot.slane %v522, %v526
          %529 = vmatprep.subr.mxu0 0.0
          %530 = vmatpush1.msra.mxu0 %v518
          %531 = vmatprep.subr.mxu0 0.0
          %532 = vmatpush1.msra.mxu0 %v519
          %533 = vmatprep.subr.mxu0 0.0
          %534 = vmatpush1.msra.mxu0 %v520
          %535 = vmatprep.subr.mxu0 0.0
          %536 = vmatpush1.msra.mxu0 %v521
          %537 = vmatprep.subr.mxu0 0.0
          %538 = vmatpush1.msra.mxu0 0.0
          %539 = vmatprep.subr.mxu0 0.0
          %540 = vmatpush1.msra.mxu0 0.0
          %541 = vmatprep.subr.mxu0 0.0
          %542 = vmatpush1.msra.mxu0 0.0
          %543 = vmatprep.subr.mxu0 0.0
          %544 = vmatpush1.msra.mxu0 0.0
          %545 = vmatprep.subr.mxu0 0.0
          %546 = vmatpush1.msra.mxu0 0.0
          %547 = vmatprep.subr.mxu0 0.0
          %548 = vmatpush1.msra.mxu0 0.0
          %549 = vmatprep.subr.mxu0 0.0
          %550 = vmatpush1.msra.mxu0 0.0
          %551 = vmatprep.subr.mxu0 0.0
          %552 = vmatpush1.msra.mxu0 0.0
          %553 = vmatprep.subr.mxu0 0.0
          %554 = vmatpush1.msra.mxu0 0.0
          %555 = vmatprep.subr.mxu0 0.0
          %556 = vmatpush1.msra.mxu0 0.0
          %557 = vmatprep.subr.mxu0 0.0
          %558 = vmatpush1.msra.mxu0 0.0
          %559 = vmatprep.subr.mxu0 0.0
          %560 = vmatpush1.msra.mxu0 0.0
          %561 = vmatprep.subr.mxu0 0.0
          %562 = vmatpush1.msra.mxu0 0.0
          %563 = vmatprep.subr.mxu0 0.0
          %564 = vmatpush1.msra.mxu0 0.0
          %565 = vmatprep.subr.mxu0 0.0
          %566 = vmatpush1.msra.mxu0 0.0
          %567 = vmatprep.subr.mxu0 0.0
          %568 = vmatpush1.msra.mxu0 0.0
          %569 = vmatprep.subr.mxu0 0.0
          %570 = vmatpush1.msra.mxu0 0.0
          %571 = vmatprep.subr.mxu0 0.0
          %572 = vmatpush1.msra.mxu0 0.0
          %573 = vmatprep.subr.mxu0 0.0
          %574 = vmatpush1.msra.mxu0 0.0
          %575 = vmatprep.subr.mxu0 0.0
          %576 = vmatpush1.msra.mxu0 0.0
          %577 = vmatprep.subr.mxu0 0.0
          %578 = vmatpush1.msra.mxu0 0.0
          %579 = vmatprep.subr.mxu0 0.0
          %580 = vmatpush1.msra.mxu0 0.0
          %581 = vmatprep.subr.mxu0 0.0
          %582 = vmatpush1.msra.mxu0 0.0
          %583 = vmatprep.subr.mxu0 0.0
          %584 = vmatpush1.msra.mxu0 0.0
          %585 = vmatprep.subr.mxu0 0.0
          %586 = vmatpush1.msra.mxu0 0.0
          %587 = vmatprep.subr.mxu0 0.0
          %588 = vmatpush1.msra.mxu0 0.0
          %589 = vmatprep.subr.mxu0 0.0
          %590 = vmatpush1.msra.mxu0 0.0
          %591 = vmatprep.subr.mxu0 0.0
          %592 = vmatpush1.msra.mxu0 0.0
          %593 = vmatprep.mubr.f32.mxu0 0.0
          %594 = vmatmul.mubr.f32.gmra.mrb[0].mxu0 %v445
          %v595 = vpop.f32.mrb[0].mxu0
          %v596 = vadd.f32 %v527, %v595
          %v597 = vpop.f32.mrb[0].mxu0
          %598 = vdwg.mxu0
          %599 = vst.msk [vmem:[#allocation3] sm:$0xff] %vm443, %v596
        $region68: #{tpu_custom_call.1} parent=47 // pred_fallthru
          _
        %s600 = smul.u32 %s33, 8
        %s601 = scalar_lea.vmem %s366, %s600 [#allocation4]
        %v602 = vld [vmem:[%s601] sm:$0xff]
        %v603 = vld [vmem:[#allocation7] sm:$0xff]
        %v604 = vld [vmem:[#allocation7 + $0x8] sm:$0xff]
        %v605 = vld [vmem:[#allocation7 + $0x10] sm:$0xff]
        %v606 = vld [vmem:[#allocation7 + $0x18] sm:$0xff]
        %v607 = vld [vmem:[%s420] sm:$0x1]
        %v609 = vlaneseq
        %v610 = vshrl.u32 %v609, 7
        %v611 = vsub.s32 0, %v610
        %v612 = vrot.slane %v607, %v611
        %vm614 = vcmask 261120
        %v616 = vsel %vm614, %v602, 0
        %618 = vmatprep.subr.mxu0 0.0
        %619 = vmatpush1.msra.mxu0 %v603
        %620 = vmatprep.subr.mxu0 0.0
        %621 = vmatpush1.msra.mxu0 %v604
        %622 = vmatprep.subr.mxu0 0.0
        %623 = vmatpush1.msra.mxu0 %v605
        %624 = vmatprep.subr.mxu0 0.0
        %625 = vmatpush1.msra.mxu0 %v606
        %626 = vmatprep.subr.mxu0 0.0
        %627 = vmatpush1.msra.mxu0 0.0
        %628 = vmatprep.subr.mxu0 0.0
        %629 = vmatpush1.msra.mxu0 0.0
        %630 = vmatprep.subr.mxu0 0.0
        %631 = vmatpush1.msra.mxu0 0.0
        %632 = vmatprep.subr.mxu0 0.0
        %633 = vmatpush1.msra.mxu0 0.0
        %634 = vmatprep.subr.mxu0 0.0
        %635 = vmatpush1.msra.mxu0 0.0
        %636 = vmatprep.subr.mxu0 0.0
        %637 = vmatpush1.msra.mxu0 0.0
        %638 = vmatprep.subr.mxu0 0.0
        %639 = vmatpush1.msra.mxu0 0.0
        %640 = vmatprep.subr.mxu0 0.0
        %641 = vmatpush1.msra.mxu0 0.0
        %642 = vmatprep.subr.mxu0 0.0
        %643 = vmatpush1.msra.mxu0 0.0
        %644 = vmatprep.subr.mxu0 0.0
        %645 = vmatpush1.msra.mxu0 0.0
        %646 = vmatprep.subr.mxu0 0.0
        %647 = vmatpush1.msra.mxu0 0.0
        %648 = vmatprep.subr.mxu0 0.0
        %649 = vmatpush1.msra.mxu0 0.0
        %650 = vmatprep.subr.mxu0 0.0
        %651 = vmatpush1.msra.mxu0 0.0
        %652 = vmatprep.subr.mxu0 0.0
        %653 = vmatpush1.msra.mxu0 0.0
        %654 = vmatprep.subr.mxu0 0.0
        %655 = vmatpush1.msra.mxu0 0.0
        %656 = vmatprep.subr.mxu0 0.0
        %657 = vmatpush1.msra.mxu0 0.0
        %658 = vmatprep.subr.mxu0 0.0
        %659 = vmatpush1.msra.mxu0 0.0
        %660 = vmatprep.subr.mxu0 0.0
        %661 = vmatpush1.msra.mxu0 0.0
        %662 = vmatprep.subr.mxu0 0.0
        %663 = vmatpush1.msra.mxu0 0.0
        %664 = vmatprep.subr.mxu0 0.0
        %665 = vmatpush1.msra.mxu0 0.0
        %666 = vmatprep.subr.mxu0 0.0
        %667 = vmatpush1.msra.mxu0 0.0
        %668 = vmatprep.subr.mxu0 0.0
        %669 = vmatpush1.msra.mxu0 0.0
        %670 = vmatprep.subr.mxu0 0.0
        %671 = vmatpush1.msra.mxu0 0.0
        %672 = vmatprep.subr.mxu0 0.0
        %673 = vmatpush1.msra.mxu0 0.0
        %674 = vmatprep.subr.mxu0 0.0
        %675 = vmatpush1.msra.mxu0 0.0
        %676 = vmatprep.subr.mxu0 0.0
        %677 = vmatpush1.msra.mxu0 0.0
        %678 = vmatprep.subr.mxu0 0.0
        %679 = vmatpush1.msra.mxu0 0.0
        %680 = vmatprep.subr.mxu0 0.0
        %681 = vmatpush1.msra.mxu0 0.0
        %682 = vmatprep.mubr.f32.mxu0 0.0
        %683 = vmatmul.mubr.f32.gmra.mrb[0].mxu0 %v616
        %v684 = vpop.f32.mrb[0].mxu0
        %v685 = vadd.f32 %v612, %v684
        %v686 = vpop.f32.mrb[0].mxu0
        %687 = vdwg.mxu0
        %v688 = vld [vmem:[#allocation2] sm:$0xff]
        %v689 = vld [vmem:[#allocation3] sm:$0xff]
        %vm690 = vcmask 64512
        %v692 = vsel %vm690, %v685, 0
        %v695 = vsel %vm690, %v688, 0
        %697 = vmatprep.subr.mxu0 0.0
        %698 = vmatpush1.xpose.msra.mxu0 %v695
        %699 = vmatprep.subr.mxu0 0.0
        %700 = vmatpush1.xpose.msra.mxu0 0.0
        %701 = vmatprep.subr.mxu0 0.0
        %702 = vmatpush1.xpose.msra.mxu0 0.0
        %703 = vmatprep.subr.mxu0 0.0
        %704 = vmatpush1.xpose.msra.mxu0 0.0
        %705 = vmatprep.subr.mxu0 0.0
        %706 = vmatpush1.xpose.msra.mxu0 0.0
        %707 = vmatprep.subr.mxu0 0.0
        %708 = vmatpush1.xpose.msra.mxu0 0.0
        %709 = vmatprep.subr.mxu0 0.0
        %710 = vmatpush1.xpose.msra.mxu0 0.0
        %711 = vmatprep.subr.mxu0 0.0
        %712 = vmatpush1.xpose.msra.mxu0 0.0
        %713 = vmatprep.subr.mxu0 0.0
        %714 = vmatpush1.xpose.msra.mxu0 0.0
        %715 = vmatprep.subr.mxu0 0.0
        %716 = vmatpush1.xpose.msra.mxu0 0.0
        %717 = vmatprep.subr.mxu0 0.0
        %718 = vmatpush1.xpose.msra.mxu0 0.0
        %719 = vmatprep.subr.mxu0 0.0
        %720 = vmatpush1.xpose.msra.mxu0 0.0
        %721 = vmatprep.subr.mxu0 0.0
        %722 = vmatpush1.xpose.msra.mxu0 0.0
        %723 = vmatprep.subr.mxu0 0.0
        %724 = vmatpush1.xpose.msra.mxu0 0.0
        %725 = vmatprep.subr.mxu0 0.0
        %726 = vmatpush1.xpose.msra.mxu0 0.0
        %727 = vmatprep.subr.mxu0 0.0
        %728 = vmatpush1.xpose.msra.mxu0 0.0
        %729 = vmatprep.subr.mxu0 0.0
        %730 = vmatpush1.xpose.msra.mxu0 0.0
        %731 = vmatprep.subr.mxu0 0.0
        %732 = vmatpush1.xpose.msra.mxu0 0.0
        %733 = vmatprep.subr.mxu0 0.0
        %734 = vmatpush1.xpose.msra.mxu0 0.0
        %735 = vmatprep.subr.mxu0 0.0
        %736 = vmatpush1.xpose.msra.mxu0 0.0
        %737 = vmatprep.subr.mxu0 0.0
        %738 = vmatpush1.xpose.msra.mxu0 0.0
        %739 = vmatprep.subr.mxu0 0.0
        %740 = vmatpush1.xpose.msra.mxu0 0.0
        %741 = vmatprep.subr.mxu0 0.0
        %742 = vmatpush1.xpose.msra.mxu0 0.0
        %743 = vmatprep.subr.mxu0 0.0
        %744 = vmatpush1.xpose.msra.mxu0 0.0
        %745 = vmatprep.subr.mxu0 0.0
        %746 = vmatpush1.xpose.msra.mxu0 0.0
        %747 = vmatprep.subr.mxu0 0.0
        %748 = vmatpush1.xpose.msra.mxu0 0.0
        %749 = vmatprep.subr.mxu0 0.0
        %750 = vmatpush1.xpose.msra.mxu0 0.0
        %751 = vmatprep.subr.mxu0 0.0
        %752 = vmatpush1.xpose.msra.mxu0 0.0
        %753 = vmatprep.subr.mxu0 0.0
        %754 = vmatpush1.xpose.msra.mxu0 0.0
        %755 = vmatprep.subr.mxu0 0.0
        %756 = vmatpush1.xpose.msra.mxu0 0.0
        %757 = vmatprep.subr.mxu0 0.0
        %758 = vmatpush1.xpose.msra.mxu0 0.0
        %759 = vmatprep.subr.mxu0 0.0
        %760 = vmatpush1.xpose.msra.mxu0 0.0
        %761 = vmatprep.mubr.f32.mxu0 0.0
        %762 = vmatmul.mubr.f32.gmra.mrb[0].mxu0 %v692
        %v763 = vpop.f32.mrb[0].mxu0
        %v764 = vadd.f32 0.0, %v763
        %v765 = vpop.f32.mrb[0].mxu0
        %766 = vdwg.mxu0
        %v767 = vsel %vm690, %v764, -inf
        %768 = vmax.xlane.f32.xlu0 %v767
        %v769 = vpop.xlane.xlu0 %768
        %v770 = vsub.f32 %v764, %v769
        %v771 = vmul.f32 %v770, 1.442695
        %v772 = vpow.pop %v771
        %v773 = vsel %vm690, %v772, 0.0
        %774 = vadd.xlane.f32.xlu0 %v773
        %v775 = vpop.xlane.xlu0 %774
        %v777 = vsel %vm690, %v772, 0
        %779 = vmatprep.subr.mxu0 0.0
        %780 = vmatpush1.msra.mxu0 %v689
        %781 = vmatprep.subr.mxu0 0.0
        %782 = vmatpush1.msra.mxu0 0.0
        %783 = vmatprep.subr.mxu0 0.0
        %784 = vmatpush1.msra.mxu0 0.0
        %785 = vmatprep.subr.mxu0 0.0
        %786 = vmatpush1.msra.mxu0 0.0
        %787 = vmatprep.subr.mxu0 0.0
        %788 = vmatpush1.msra.mxu0 0.0
        %789 = vmatprep.subr.mxu0 0.0
        %790 = vmatpush1.msra.mxu0 0.0
        %791 = vmatprep.subr.mxu0 0.0
        %792 = vmatpush1.msra.mxu0 0.0
        %793 = vmatprep.subr.mxu0 0.0
        %794 = vmatpush1.msra.mxu0 0.0
        %795 = vmatprep.subr.mxu0 0.0
        %796 = vmatpush1.msra.mxu0 0.0
        %797 = vmatprep.subr.mxu0 0.0
        %798 = vmatpush1.msra.mxu0 0.0
        %799 = vmatprep.subr.mxu0 0.0
        %800 = vmatpush1.msra.mxu0 0.0
        %801 = vmatprep.subr.mxu0 0.0
        %802 = vmatpush1.msra.mxu0 0.0
        %803 = vmatprep.subr.mxu0 0.0
        %804 = vmatpush1.msra.mxu0 0.0
        %805 = vmatprep.subr.mxu0 0.0
        %806 = vmatpush1.msra.mxu0 0.0
        %807 = vmatprep.subr.mxu0 0.0
        %808 = vmatpush1.msra.mxu0 0.0
        %809 = vmatprep.subr.mxu0 0.0
        %810 = vmatpush1.msra.mxu0 0.0
        %811 = vmatprep.subr.mxu0 0.0
        %812 = vmatpush1.msra.mxu0 0.0
        %813 = vmatprep.subr.mxu0 0.0
        %814 = vmatpush1.msra.mxu0 0.0
        %815 = vmatprep.subr.mxu0 0.0
        %816 = vmatpush1.msra.mxu0 0.0
        %817 = vmatprep.subr.mxu0 0.0
        %818 = vmatpush1.msra.mxu0 0.0
        %819 = vmatprep.subr.mxu0 0.0
        %820 = vmatpush1.msra.mxu0 0.0
        %821 = vmatprep.subr.mxu0 0.0
        %822 = vmatpush1.msra.mxu0 0.0
        %823 = vmatprep.subr.mxu0 0.0
        %824 = vmatpush1.msra.mxu0 0.0
        %825 = vmatprep.subr.mxu0 0.0
        %826 = vmatpush1.msra.mxu0 0.0
        %827 = vmatprep.subr.mxu0 0.0
        %828 = vmatpush1.msra.mxu0 0.0
        %829 = vmatprep.subr.mxu0 0.0
        %830 = vmatpush1.msra.mxu0 0.0
        %831 = vmatprep.subr.mxu0 0.0
        %832 = vmatpush1.msra.mxu0 0.0
        %833 = vmatprep.subr.mxu0 0.0
        %834 = vmatpush1.msra.mxu0 0.0
        %835 = vmatprep.subr.mxu0 0.0
        %836 = vmatpush1.msra.mxu0 0.0
        %837 = vmatprep.subr.mxu0 0.0
        %838 = vmatpush1.msra.mxu0 0.0
        %839 = vmatprep.subr.mxu0 0.0
        %840 = vmatpush1.msra.mxu0 0.0
        %841 = vmatprep.subr.mxu0 0.0
        %842 = vmatpush1.msra.mxu0 0.0
        %843 = vmatprep.mubr.f32.mxu0 0.0
        %844 = vmatmul.mubr.f32.gmra.mrb[0].mxu0 %v777
        %v845 = vpop.f32.mrb[0].mxu0
        %v846 = vadd.f32 0.0, %v845
        %v847 = vpop.f32.mrb[0].mxu0
        %848 = vdwg.mxu0
        %v849 = vrcp.pop %v775
        %v850 = vmul.f32 %v846, %v849
        %851 = vst.msk [vmem:[%s417] sm:$0xff] %vm690, %v850
        %852 = vrot.lane.b32.xlu0 %v685, 120
        %v853 = vpop.permute.xlu0 %852
        %854 = vrot.lane.b32.xlu0 %v688, 120
        %v855 = vpop.permute.xlu0 %854
        %v856 = vsel %vm690, %v853, 0
        %v858 = vsel %vm690, %v855, 0
        %860 = vmatprep.subr.mxu0 0.0
        %861 = vmatpush1.xpose.msra.mxu0 %v858
        %862 = vmatprep.subr.mxu0 0.0
        %863 = vmatpush1.xpose.msra.mxu0 0.0
        %864 = vmatprep.subr.mxu0 0.0
        %865 = vmatpush1.xpose.msra.mxu0 0.0
        %866 = vmatprep.subr.mxu0 0.0
        %867 = vmatpush1.xpose.msra.mxu0 0.0
        %868 = vmatprep.subr.mxu0 0.0
        %869 = vmatpush1.xpose.msra.mxu0 0.0
        %870 = vmatprep.subr.mxu0 0.0
        %871 = vmatpush1.xpose.msra.mxu0 0.0
        %872 = vmatprep.subr.mxu0 0.0
        %873 = vmatpush1.xpose.msra.mxu0 0.0
        %874 = vmatprep.subr.mxu0 0.0
        %875 = vmatpush1.xpose.msra.mxu0 0.0
        %876 = vmatprep.subr.mxu0 0.0
        %877 = vmatpush1.xpose.msra.mxu0 0.0
        %878 = vmatprep.subr.mxu0 0.0
        %879 = vmatpush1.xpose.msra.mxu0 0.0
        %880 = vmatprep.subr.mxu0 0.0
        %881 = vmatpush1.xpose.msra.mxu0 0.0
        %882 = vmatprep.subr.mxu0 0.0
        %883 = vmatpush1.xpose.msra.mxu0 0.0
        %884 = vmatprep.subr.mxu0 0.0
        %885 = vmatpush1.xpose.msra.mxu0 0.0
        %886 = vmatprep.subr.mxu0 0.0
        %887 = vmatpush1.xpose.msra.mxu0 0.0
        %888 = vmatprep.subr.mxu0 0.0
        %889 = vmatpush1.xpose.msra.mxu0 0.0
        %890 = vmatprep.subr.mxu0 0.0
        %891 = vmatpush1.xpose.msra.mxu0 0.0
        %892 = vmatprep.subr.mxu0 0.0
        %893 = vmatpush1.xpose.msra.mxu0 0.0
        %894 = vmatprep.subr.mxu0 0.0
        %895 = vmatpush1.xpose.msra.mxu0 0.0
        %896 = vmatprep.subr.mxu0 0.0
        %897 = vmatpush1.xpose.msra.mxu0 0.0
        %898 = vmatprep.subr.mxu0 0.0
        %899 = vmatpush1.xpose.msra.mxu0 0.0
        %900 = vmatprep.subr.mxu0 0.0
        %901 = vmatpush1.xpose.msra.mxu0 0.0
        %902 = vmatprep.subr.mxu0 0.0
        %903 = vmatpush1.xpose.msra.mxu0 0.0
        %904 = vmatprep.subr.mxu0 0.0
        %905 = vmatpush1.xpose.msra.mxu0 0.0
        %906 = vmatprep.subr.mxu0 0.0
        %907 = vmatpush1.xpose.msra.mxu0 0.0
        %908 = vmatprep.subr.mxu0 0.0
        %909 = vmatpush1.xpose.msra.mxu0 0.0
        %910 = vmatprep.subr.mxu0 0.0
        %911 = vmatpush1.xpose.msra.mxu0 0.0
        %912 = vmatprep.subr.mxu0 0.0
        %913 = vmatpush1.xpose.msra.mxu0 0.0
        %914 = vmatprep.subr.mxu0 0.0
        %915 = vmatpush1.xpose.msra.mxu0 0.0
        %916 = vmatprep.subr.mxu0 0.0
        %917 = vmatpush1.xpose.msra.mxu0 0.0
        %918 = vmatprep.subr.mxu0 0.0
        %919 = vmatpush1.xpose.msra.mxu0 0.0
        %920 = vmatprep.subr.mxu0 0.0
        %921 = vmatpush1.xpose.msra.mxu0 0.0
        %922 = vmatprep.subr.mxu0 0.0
        %923 = vmatpush1.xpose.msra.mxu0 0.0
        %924 = vmatprep.mubr.f32.mxu0 0.0
        %925 = vmatmul.mubr.f32.gmra.mrb[0].mxu0 %v856
        %v926 = vpop.f32.mrb[0].mxu0
        %v927 = vadd.f32 0.0, %v926
        %v928 = vpop.f32.mrb[0].mxu0
        %929 = vdwg.mxu0
        %v930 = vsel %vm690, %v927, -inf
        %931 = vmax.xlane.f32.xlu0 %v930
        %v932 = vpop.xlane.xlu0 %931
        %v933 = vsub.f32 %v927, %v932
        %v934 = vmul.f32 %v933, 1.442695
        %v935 = vpow.pop %v934
        %v936 = vsel %vm690, %v935, 0.0
        %937 = vadd.xlane.f32.xlu0 %v936
        %v938 = vpop.xlane.xlu0 %937
        %940 = vrot.lane.b32.xlu0 %v689, 120
        %v941 = vpop.permute.xlu0 %940
        %v944 = vsel %vm690, %v935, 0
        %946 = vmatprep.subr.mxu0 0.0
        %947 = vmatpush1.msra.mxu0 %v941
        %948 = vmatprep.subr.mxu0 0.0
        %949 = vmatpush1.msra.mxu0 0.0
        %950 = vmatprep.subr.mxu0 0.0
        %951 = vmatpush1.msra.mxu0 0.0
        %952 = vmatprep.subr.mxu0 0.0
        %953 = vmatpush1.msra.mxu0 0.0
        %954 = vmatprep.subr.mxu0 0.0
        %955 = vmatpush1.msra.mxu0 0.0
        %956 = vmatprep.subr.mxu0 0.0
        %957 = vmatpush1.msra.mxu0 0.0
        %958 = vmatprep.subr.mxu0 0.0
        %959 = vmatpush1.msra.mxu0 0.0
        %960 = vmatprep.subr.mxu0 0.0
        %961 = vmatpush1.msra.mxu0 0.0
        %962 = vmatprep.subr.mxu0 0.0
        %963 = vmatpush1.msra.mxu0 0.0
        %964 = vmatprep.subr.mxu0 0.0
        %965 = vmatpush1.msra.mxu0 0.0
        %966 = vmatprep.subr.mxu0 0.0
        %967 = vmatpush1.msra.mxu0 0.0
        %968 = vmatprep.subr.mxu0 0.0
        %969 = vmatpush1.msra.mxu0 0.0
        %970 = vmatprep.subr.mxu0 0.0
        %971 = vmatpush1.msra.mxu0 0.0
        %972 = vmatprep.subr.mxu0 0.0
        %973 = vmatpush1.msra.mxu0 0.0
        %974 = vmatprep.subr.mxu0 0.0
        %975 = vmatpush1.msra.mxu0 0.0
        %976 = vmatprep.subr.mxu0 0.0
        %977 = vmatpush1.msra.mxu0 0.0
        %978 = vmatprep.subr.mxu0 0.0
        %979 = vmatpush1.msra.mxu0 0.0
        %980 = vmatprep.subr.mxu0 0.0
        %981 = vmatpush1.msra.mxu0 0.0
        %982 = vmatprep.subr.mxu0 0.0
        %983 = vmatpush1.msra.mxu0 0.0
        %984 = vmatprep.subr.mxu0 0.0
        %985 = vmatpush1.msra.mxu0 0.0
        %986 = vmatprep.subr.mxu0 0.0
        %987 = vmatpush1.msra.mxu0 0.0
        %988 = vmatprep.subr.mxu0 0.0
        %989 = vmatpush1.msra.mxu0 0.0
        %990 = vmatprep.subr.mxu0 0.0
        %991 = vmatpush1.msra.mxu0 0.0
        %992 = vmatprep.subr.mxu0 0.0
        %993 = vmatpush1.msra.mxu0 0.0
        %994 = vmatprep.subr.mxu0 0.0
        %995 = vmatpush1.msra.mxu0 0.0
        %996 = vmatprep.subr.mxu0 0.0
        %997 = vmatpush1.msra.mxu0 0.0
        %998 = vmatprep.subr.mxu0 0.0
        %999 = vmatpush1.msra.mxu0 0.0
        %1000 = vmatprep.subr.mxu0 0.0
        %1001 = vmatpush1.msra.mxu0 0.0
        %1002 = vmatprep.subr.mxu0 0.0
        %1003 = vmatpush1.msra.mxu0 0.0
        %1004 = vmatprep.subr.mxu0 0.0
        %1005 = vmatpush1.msra.mxu0 0.0
        %1006 = vmatprep.subr.mxu0 0.0
        %1007 = vmatpush1.msra.mxu0 0.0
        %1008 = vmatprep.subr.mxu0 0.0
        %1009 = vmatpush1.msra.mxu0 0.0
        %1010 = vmatprep.mubr.f32.mxu0 0.0
        %1011 = vmatmul.mubr.f32.gmra.mrb[0].mxu0 %v944
        %v1012 = vpop.f32.mrb[0].mxu0
        %v1013 = vadd.f32 0.0, %v1012
        %v1014 = vpop.f32.mrb[0].mxu0
        %1015 = vdwg.mxu0
        %v1016 = vrcp.pop %v938
        %v1017 = vmul.f32 %v1013, %v1016
        %1019 = vrot.lane.b32.xlu0 %v1017, 8
        %v1020 = vpop.permute.xlu0 %1019
        %vm1022 = vcmask 130112
        %1023 = vst.msk [vmem:[%s417] sm:$0xff] %vm1022, %v1020
        %1024 = vrot.lane.b32.xlu0 %v685, 112
        %v1025 = vpop.permute.xlu0 %1024
        %1026 = vrot.lane.b32.xlu0 %v688, 112
        %v1027 = vpop.permute.xlu0 %1026
        %v1028 = vsel %vm690, %v1025, 0
        %v1030 = vsel %vm690, %v1027, 0
        %1032 = vmatprep.subr.mxu0 0.0
        %1033 = vmatpush1.xpose.msra.mxu0 %v1030
        %1034 = vmatprep.subr.mxu0 0.0
        %1035 = vmatpush1.xpose.msra.mxu0 0.0
        %1036 = vmatprep.subr.mxu0 0.0
        %1037 = vmatpush1.xpose.msra.mxu0 0.0
        %1038 = vmatprep.subr.mxu0 0.0
        %1039 = vmatpush1.xpose.msra.mxu0 0.0
        %1040 = vmatprep.subr.mxu0 0.0
        %1041 = vmatpush1.xpose.msra.mxu0 0.0
        %1042 = vmatprep.subr.mxu0 0.0
        %1043 = vmatpush1.xpose.msra.mxu0 0.0
        %1044 = vmatprep.subr.mxu0 0.0
        %1045 = vmatpush1.xpose.msra.mxu0 0.0
        %1046 = vmatprep.subr.mxu0 0.0
        %1047 = vmatpush1.xpose.msra.mxu0 0.0
        %1048 = vmatprep.subr.mxu0 0.0
        %1049 = vmatpush1.xpose.msra.mxu0 0.0
        %1050 = vmatprep.subr.mxu0 0.0
        %1051 = vmatpush1.xpose.msra.mxu0 0.0
        %1052 = vmatprep.subr.mxu0 0.0
        %1053 = vmatpush1.xpose.msra.mxu0 0.0
        %1054 = vmatprep.subr.mxu0 0.0
        %1055 = vmatpush1.xpose.msra.mxu0 0.0
        %1056 = vmatprep.subr.mxu0 0.0
        %1057 = vmatpush1.xpose.msra.mxu0 0.0
        %1058 = vmatprep.subr.mxu0 0.0
        %1059 = vmatpush1.xpose.msra.mxu0 0.0
        %1060 = vmatprep.subr.mxu0 0.0
        %1061 = vmatpush1.xpose.msra.mxu0 0.0
        %1062 = vmatprep.subr.mxu0 0.0
        %1063 = vmatpush1.xpose.msra.mxu0 0.0
        %1064 = vmatprep.subr.mxu0 0.0
        %1065 = vmatpush1.xpose.msra.mxu0 0.0
        %1066 = vmatprep.subr.mxu0 0.0
        %1067 = vmatpush1.xpose.msra.mxu0 0.0
        %1068 = vmatprep.subr.mxu0 0.0
        %1069 = vmatpush1.xpose.msra.mxu0 0.0
        %1070 = vmatprep.subr.mxu0 0.0
        %1071 = vmatpush1.xpose.msra.mxu0 0.0
        %1072 = vmatprep.subr.mxu0 0.0
        %1073 = vmatpush1.xpose.msra.mxu0 0.0
        %1074 = vmatprep.subr.mxu0 0.0
        %1075 = vmatpush1.xpose.msra.mxu0 0.0
        %1076 = vmatprep.subr.mxu0 0.0
        %1077 = vmatpush1.xpose.msra.mxu0 0.0
        %1078 = vmatprep.subr.mxu0 0.0
        %1079 = vmatpush1.xpose.msra.mxu0 0.0
        %1080 = vmatprep.subr.mxu0 0.0
        %1081 = vmatpush1.xpose.msra.mxu0 0.0
        %1082 = vmatprep.subr.mxu0 0.0
        %1083 = vmatpush1.xpose.msra.mxu0 0.0
        %1084 = vmatprep.subr.mxu0 0.0
        %1085 = vmatpush1.xpose.msra.mxu0 0.0
        %1086 = vmatprep.subr.mxu0 0.0
        %1087 = vmatpush1.xpose.msra.mxu0 0.0
        %1088 = vmatprep.subr.mxu0 0.0
        %1089 = vmatpush1.xpose.msra.mxu0 0.0
        %1090 = vmatprep.subr.mxu0 0.0
        %1091 = vmatpush1.xpose.msra.mxu0 0.0
        %1092 = vmatprep.subr.mxu0 0.0
        %1093 = vmatpush1.xpose.msra.mxu0 0.0
        %1094 = vmatprep.subr.mxu0 0.0
        %1095 = vmatpush1.xpose.msra.mxu0 0.0
        %1096 = vmatprep.mubr.f32.mxu0 0.0
        %1097 = vmatmul.mubr.f32.gmra.mrb[0].mxu0 %v1028
        %v1098 = vpop.f32.mrb[0].mxu0
        %v1099 = vadd.f32 0.0, %v1098
        %v1100 = vpop.f32.mrb[0].mxu0
        %1101 = vdwg.mxu0
        %v1102 = vsel %vm690, %v1099, -inf
        %1103 = vmax.xlane.f32.xlu0 %v1102
        %v1104 = vpop.xlane.xlu0 %1103
        %v1105 = vsub.f32 %v1099, %v1104
        %v1106 = vmul.f32 %v1105, 1.442695
        %v1107 = vpow.pop %v1106
        %v1108 = vsel %vm690, %v1107, 0.0
        %1109 = vadd.xlane.f32.xlu0 %v1108
        %v1110 = vpop.xlane.xlu0 %1109
        %1111 = vrot.lane.b32.xlu0 %v689, 112
        %v1112 = vpop.permute.xlu0 %1111
        %v1115 = vsel %vm690, %v1107, 0
        %1117 = vmatprep.subr.mxu0 0.0
        %1118 = vmatpush1.msra.mxu0 %v1112
        %1119 = vmatprep.subr.mxu0 0.0
        %1120 = vmatpush1.msra.mxu0 0.0
        %1121 = vmatprep.subr.mxu0 0.0
        %1122 = vmatpush1.msra.mxu0 0.0
        %1123 = vmatprep.subr.mxu0 0.0
        %1124 = vmatpush1.msra.mxu0 0.0
        %1125 = vmatprep.subr.mxu0 0.0
        %1126 = vmatpush1.msra.mxu0 0.0
        %1127 = vmatprep.subr.mxu0 0.0
        %1128 = vmatpush1.msra.mxu0 0.0
        %1129 = vmatprep.subr.mxu0 0.0
        %1130 = vmatpush1.msra.mxu0 0.0
        %1131 = vmatprep.subr.mxu0 0.0
        %1132 = vmatpush1.msra.mxu0 0.0
        %1133 = vmatprep.subr.mxu0 0.0
        %1134 = vmatpush1.msra.mxu0 0.0
        %1135 = vmatprep.subr.mxu0 0.0
        %1136 = vmatpush1.msra.mxu0 0.0
        %1137 = vmatprep.subr.mxu0 0.0
        %1138 = vmatpush1.msra.mxu0 0.0
        %1139 = vmatprep.subr.mxu0 0.0
        %1140 = vmatpush1.msra.mxu0 0.0
        %1141 = vmatprep.subr.mxu0 0.0
        %1142 = vmatpush1.msra.mxu0 0.0
        %1143 = vmatprep.subr.mxu0 0.0
        %1144 = vmatpush1.msra.mxu0 0.0
        %1145 = vmatprep.subr.mxu0 0.0
        %1146 = vmatpush1.msra.mxu0 0.0
        %1147 = vmatprep.subr.mxu0 0.0
        %1148 = vmatpush1.msra.mxu0 0.0
        %1149 = vmatprep.subr.mxu0 0.0
        %1150 = vmatpush1.msra.mxu0 0.0
        %1151 = vmatprep.subr.mxu0 0.0
        %1152 = vmatpush1.msra.mxu0 0.0
        %1153 = vmatprep.subr.mxu0 0.0
        %1154 = vmatpush1.msra.mxu0 0.0
        %1155 = vmatprep.subr.mxu0 0.0
        %1156 = vmatpush1.msra.mxu0 0.0
        %1157 = vmatprep.subr.mxu0 0.0
        %1158 = vmatpush1.msra.mxu0 0.0
        %1159 = vmatprep.subr.mxu0 0.0
        %1160 = vmatpush1.msra.mxu0 0.0
        %1161 = vmatprep.subr.mxu0 0.0
        %1162 = vmatpush1.msra.mxu0 0.0
        %1163 = vmatprep.subr.mxu0 0.0
        %1164 = vmatpush1.msra.mxu0 0.0
        %1165 = vmatprep.subr.mxu0 0.0
        %1166 = vmatpush1.msra.mxu0 0.0
        %1167 = vmatprep.subr.mxu0 0.0
        %1168 = vmatpush1.msra.mxu0 0.0
        %1169 = vmatprep.subr.mxu0 0.0
        %1170 = vmatpush1.msra.mxu0 0.0
        %1171 = vmatprep.subr.mxu0 0.0
        %1172 = vmatpush1.msra.mxu0 0.0
        %1173 = vmatprep.subr.mxu0 0.0
        %1174 = vmatpush1.msra.mxu0 0.0
        %1175 = vmatprep.subr.mxu0 0.0
        %1176 = vmatpush1.msra.mxu0 0.0
        %1177 = vmatprep.subr.mxu0 0.0
        %1178 = vmatpush1.msra.mxu0 0.0
        %1179 = vmatprep.subr.mxu0 0.0
        %1180 = vmatpush1.msra.mxu0 0.0
        %1181 = vmatprep.mubr.f32.mxu0 0.0
        %1182 = vmatmul.mubr.f32.gmra.mrb[0].mxu0 %v1115
        %v1183 = vpop.f32.mrb[0].mxu0
        %v1184 = vadd.f32 0.0, %v1183
        %v1185 = vpop.f32.mrb[0].mxu0
        %1186 = vdwg.mxu0
        %v1187 = vrcp.pop %v1110
        %v1188 = vmul.f32 %v1184, %v1187
        %1190 = vrot.lane.b32.xlu0 %v1188, 16
        %v1191 = vpop.permute.xlu0 %1190
        %vm1193 = vcmask 195712
        %1194 = vst.msk [vmem:[%s417] sm:$0xff] %vm1193, %v1191
        %1195 = vrot.lane.b32.xlu0 %v685, 104
        %v1196 = vpop.permute.xlu0 %1195
        %1197 = vrot.lane.b32.xlu0 %v688, 104
        %v1198 = vpop.permute.xlu0 %1197
        %v1199 = vsel %vm690, %v1196, 0
        %v1201 = vsel %vm690, %v1198, 0
        %1203 = vmatprep.subr.mxu0 0.0
        %1204 = vmatpush1.xpose.msra.mxu0 %v1201
        %1205 = vmatprep.subr.mxu0 0.0
        %1206 = vmatpush1.xpose.msra.mxu0 0.0
        %1207 = vmatprep.subr.mxu0 0.0
        %1208 = vmatpush1.xpose.msra.mxu0 0.0
        %1209 = vmatprep.subr.mxu0 0.0
        %1210 = vmatpush1.xpose.msra.mxu0 0.0
        %1211 = vmatprep.subr.mxu0 0.0
        %1212 = vmatpush1.xpose.msra.mxu0 0.0
        %1213 = vmatprep.subr.mxu0 0.0
        %1214 = vmatpush1.xpose.msra.mxu0 0.0
        %1215 = vmatprep.subr.mxu0 0.0
        %1216 = vmatpush1.xpose.msra.mxu0 0.0
        %1217 = vmatprep.subr.mxu0 0.0
        %1218 = vmatpush1.xpose.msra.mxu0 0.0
        %1219 = vmatprep.subr.mxu0 0.0
        %1220 = vmatpush1.xpose.msra.mxu0 0.0
        %1221 = vmatprep.subr.mxu0 0.0
        %1222 = vmatpush1.xpose.msra.mxu0 0.0
        %1223 = vmatprep.subr.mxu0 0.0
        %1224 = vmatpush1.xpose.msra.mxu0 0.0
        %1225 = vmatprep.subr.mxu0 0.0
        %1226 = vmatpush1.xpose.msra.mxu0 0.0
        %1227 = vmatprep.subr.mxu0 0.0
        %1228 = vmatpush1.xpose.msra.mxu0 0.0
        %1229 = vmatprep.subr.mxu0 0.0
        %1230 = vmatpush1.xpose.msra.mxu0 0.0
        %1231 = vmatprep.subr.mxu0 0.0
        %1232 = vmatpush1.xpose.msra.mxu0 0.0
        %1233 = vmatprep.subr.mxu0 0.0
        %1234 = vmatpush1.xpose.msra.mxu0 0.0
        %1235 = vmatprep.subr.mxu0 0.0
        %1236 = vmatpush1.xpose.msra.mxu0 0.0
        %1237 = vmatprep.subr.mxu0 0.0
        %1238 = vmatpush1.xpose.msra.mxu0 0.0
        %1239 = vmatprep.subr.mxu0 0.0
        %1240 = vmatpush1.xpose.msra.mxu0 0.0
        %1241 = vmatprep.subr.mxu0 0.0
        %1242 = vmatpush1.xpose.msra.mxu0 0.0
        %1243 = vmatprep.subr.mxu0 0.0
        %1244 = vmatpush1.xpose.msra.mxu0 0.0
        %1245 = vmatprep.subr.mxu0 0.0
        %1246 = vmatpush1.xpose.msra.mxu0 0.0
        %1247 = vmatprep.subr.mxu0 0.0
        %1248 = vmatpush1.xpose.msra.mxu0 0.0
        %1249 = vmatprep.subr.mxu0 0.0
        %1250 = vmatpush1.xpose.msra.mxu0 0.0
        %1251 = vmatprep.subr.mxu0 0.0
        %1252 = vmatpush1.xpose.msra.mxu0 0.0
        %1253 = vmatprep.subr.mxu0 0.0
        %1254 = vmatpush1.xpose.msra.mxu0 0.0
        %1255 = vmatprep.subr.mxu0 0.0
        %1256 = vmatpush1.xpose.msra.mxu0 0.0
        %1257 = vmatprep.subr.mxu0 0.0
        %1258 = vmatpush1.xpose.msra.mxu0 0.0
        %1259 = vmatprep.subr.mxu0 0.0
        %1260 = vmatpush1.xpose.msra.mxu0 0.0
        %1261 = vmatprep.subr.mxu0 0.0
        %1262 = vmatpush1.xpose.msra.mxu0 0.0
        %1263 = vmatprep.subr.mxu0 0.0
        %1264 = vmatpush1.xpose.msra.mxu0 0.0
        %1265 = vmatprep.subr.mxu0 0.0
        %1266 = vmatpush1.xpose.msra.mxu0 0.0
        %1267 = vmatprep.mubr.f32.mxu0 0.0
        %1268 = vmatmul.mubr.f32.gmra.mrb[0].mxu0 %v1199
        %v1269 = vpop.f32.mrb[0].mxu0
        %v1270 = vadd.f32 0.0, %v1269
        %v1271 = vpop.f32.mrb[0].mxu0
        %1272 = vdwg.mxu0
        %v1273 = vsel %vm690, %v1270, -inf
        %1274 = vmax.xlane.f32.xlu0 %v1273
        %v1275 = vpop.xlane.xlu0 %1274
        %v1276 = vsub.f32 %v1270, %v1275
        %v1277 = vmul.f32 %v1276, 1.442695
        %v1278 = vpow.pop %v1277
        %v1279 = vsel %vm690, %v1278, 0.0
        %1280 = vadd.xlane.f32.xlu0 %v1279
        %v1281 = vpop.xlane.xlu0 %1280
        %1282 = vrot.lane.b32.xlu0 %v689, 104
        %v1283 = vpop.permute.xlu0 %1282
        %v1286 = vsel %vm690, %v1278, 0
        %1288 = vmatprep.subr.mxu0 0.0
        %1289 = vmatpush1.msra.mxu0 %v1283
        %1290 = vmatprep.subr.mxu0 0.0
        %1291 = vmatpush1.msra.mxu0 0.0
        %1292 = vmatprep.subr.mxu0 0.0
        %1293 = vmatpush1.msra.mxu0 0.0
        %1294 = vmatprep.subr.mxu0 0.0
        %1295 = vmatpush1.msra.mxu0 0.0
        %1296 = vmatprep.subr.mxu0 0.0
        %1297 = vmatpush1.msra.mxu0 0.0
        %1298 = vmatprep.subr.mxu0 0.0
        %1299 = vmatpush1.msra.mxu0 0.0
        %1300 = vmatprep.subr.mxu0 0.0
        %1301 = vmatpush1.msra.mxu0 0.0
        %1302 = vmatprep.subr.mxu0 0.0
        %1303 = vmatpush1.msra.mxu0 0.0
        %1304 = vmatprep.subr.mxu0 0.0
        %1305 = vmatpush1.msra.mxu0 0.0
        %1306 = vmatprep.subr.mxu0 0.0
        %1307 = vmatpush1.msra.mxu0 0.0
        %1308 = vmatprep.subr.mxu0 0.0
        %1309 = vmatpush1.msra.mxu0 0.0
        %1310 = vmatprep.subr.mxu0 0.0
        %1311 = vmatpush1.msra.mxu0 0.0
        %1312 = vmatprep.subr.mxu0 0.0
        %1313 = vmatpush1.msra.mxu0 0.0
        %1314 = vmatprep.subr.mxu0 0.0
        %1315 = vmatpush1.msra.mxu0 0.0
        %1316 = vmatprep.subr.mxu0 0.0
        %1317 = vmatpush1.msra.mxu0 0.0
        %1318 = vmatprep.subr.mxu0 0.0
        %1319 = vmatpush1.msra.mxu0 0.0
        %1320 = vmatprep.subr.mxu0 0.0
        %1321 = vmatpush1.msra.mxu0 0.0
        %1322 = vmatprep.subr.mxu0 0.0
        %1323 = vmatpush1.msra.mxu0 0.0
        %1324 = vmatprep.subr.mxu0 0.0
        %1325 = vmatpush1.msra.mxu0 0.0
        %1326 = vmatprep.subr.mxu0 0.0
        %1327 = vmatpush1.msra.mxu0 0.0
        %1328 = vmatprep.subr.mxu0 0.0
        %1329 = vmatpush1.msra.mxu0 0.0
        %1330 = vmatprep.subr.mxu0 0.0
        %1331 = vmatpush1.msra.mxu0 0.0
        %1332 = vmatprep.subr.mxu0 0.0
        %1333 = vmatpush1.msra.mxu0 0.0
        %1334 = vmatprep.subr.mxu0 0.0
        %1335 = vmatpush1.msra.mxu0 0.0
        %1336 = vmatprep.subr.mxu0 0.0
        %1337 = vmatpush1.msra.mxu0 0.0
        %1338 = vmatprep.subr.mxu0 0.0
        %1339 = vmatpush1.msra.mxu0 0.0
        %1340 = vmatprep.subr.mxu0 0.0
        %1341 = vmatpush1.msra.mxu0 0.0
        %1342 = vmatprep.subr.mxu0 0.0
        %1343 = vmatpush1.msra.mxu0 0.0
        %1344 = vmatprep.subr.mxu0 0.0
        %1345 = vmatpush1.msra.mxu0 0.0
        %1346 = vmatprep.subr.mxu0 0.0
        %1347 = vmatpush1.msra.mxu0 0.0
        %1348 = vmatprep.subr.mxu0 0.0
        %1349 = vmatpush1.msra.mxu0 0.0
        %1350 = vmatprep.subr.mxu0 0.0
        %1351 = vmatpush1.msra.mxu0 0.0
        %1352 = vmatprep.mubr.f32.mxu0 0.0
        %1353 = vmatmul.mubr.f32.gmra.mrb[0].mxu0 %v1286
        %v1354 = vpop.f32.mrb[0].mxu0
        %v1355 = vadd.f32 0.0, %v1354
        %v1356 = vpop.f32.mrb[0].mxu0
        %1357 = vdwg.mxu0
        %v1358 = vrcp.pop %v1281
        %v1359 = vmul.f32 %v1355, %v1358
        %1361 = vrot.lane.b32.xlu0 %v1359, 24
        %v1362 = vpop.permute.xlu0 %1361
        %vm1364 = vcmask 261312
        %1365 = vst.msk [vmem:[%s417] sm:$0xff] %vm1364, %v1362
        %s1366 = sand.u32 %s239, 1
        %s1367 = scalar_lea.sflag [#allocation6], %s1366
        %s1368 = sand.u32 %s239, 1
        %s1369 = smul.addr %s1368, 8
        %s1370 = scalar_lea.vmem [#allocation12], %s1369
        // Predicated region
        $region69: #{tpu_custom_call.1} parent=47 // pred_check
          %p1371 = pneg %p249
        $region70: #{tpu_custom_call.1} parent=47 // pred_check_branch
          %1373 = sbr.rel (%p1371) target = $region72
        $region71: #{tpu_custom_call.1} parent=47 // pred_region
          %s1375 = ssub.s32 128, 128
          %1376 = vsyncadd %s1367, %s1375
          %s1377 = sadd.s32 %s32, %s33
          %s1378 = sadd.s32 %s1377, %s31
          %s1379 = smul.addr %s1378, 128
          %s1380 = scalar_lea.hbm %s7, %s1379
          %s1382 = sshll.u32 %s1370, 4
          %s1383 = int_to_ptr.vmem [resolvable:$true] %s1382
          %1385 = dma.vmem_to_hbm [thread:$0]  %s1383, 128, %s1380, %s1367
        $region72: #{tpu_custom_call.1} parent=47 // pred_fallthru
          _
      $region48: #{tpu_custom_call.1} parent=5 // pred_fallthru
        _
      %p1386 = scmp.le.s32.totalorder 2, %s21
      // Predicated region
      $region73: #{tpu_custom_call.1} parent=5 // pred_check
        %p1387 = pneg %p1386
      $region74: #{tpu_custom_call.1} parent=5 // pred_check_branch
        %1389 = sbr.rel (%p1387) target = $region76
      $region75: #{tpu_custom_call.1} parent=5 // pred_region
        %s1390 = ssub.s32 %s21, 2
        // Predicated region
        $region77: #{tpu_custom_call.1} parent=75 // pred_check
          %p1391 = pneg %p255
        $region78: #{tpu_custom_call.1} parent=75 // pred_check_branch
          %1393 = sbr.rel (%p1391) target = $region80
        $region79: #{tpu_custom_call.1} parent=75 // pred_region
          %s1394 = sand.u32 %s240, 1
          %s1395 = scalar_lea.sflag [#allocation6], %s1394
          %s1396 = sand.u32 %s240, 1
          %s1397 = smul.addr %s1396, 8
          %s1398 = scalar_lea.vmem [#allocation12], %s1397
          %1399 = dma.done %s1395, 128
        $region80: #{tpu_custom_call.1} parent=75 // pred_fallthru
          _
      $region76: #{tpu_custom_call.1} parent=5 // pred_fallthru
        _
    $region6: #{tpu_custom_call.1} parent=1 // loop_footer
      %s25 = sadd.s32 1, %s21
    $region7: #{tpu_custom_call.1} parent=1 // loop_footer_branch
      %20 = sbr.rel target = $region3
    $region8: #{tpu_custom_call.1} parent=1 // loop_exit
      _
    %1400 = vsyncpa [#allocation5], 1
    %s1401 = scalar_lea.sflag [#allocation5], 1
    %1402 = vsyncpa %s1401, 1
    %1403 = vsyncpa [#allocation8], 1
    %1404 = vsyncpa [#allocation11], 1
    %1405 = vsyncpa [#allocation6], 1
    %s1406 = scalar_lea.sflag [#allocation6], 1
    %1407 = vsyncpa %s1406, 1

</llo_original>
